<compile_context>
chip_gen: v6e
topology: v6e:2x2x1
jax: 0.10.0
libtpu: 0.0.40
codegen_flags: <defaults>
</compile_context>

<pallas_src>
import functools

import jax
import jax.numpy as jnp
from jax.experimental import pallas as pl
from jax.experimental.pallas import tpu as pltpu


def _sgc_imdb_kernel(a_ref, x_ref, wc_ref, pv_ref, wp_ref, bp_ref, out_ref,
                     *, k, eps):
    # a_ref: (1, G*N, G*N) block-diagonal normalized adjacency for this step.
    # x_ref: (G, N, D) node features for this step.
    a = a_ref[0].astype(jnp.bfloat16)            # (GN, GN), cast once
    h = x_ref[...]                               # (G, N, D)
    G, N, D = h.shape

    # Flatten all G graphs of this step into one tall slab.
    # (N is a multiple of 8, so this is a free relayout, not a VMEM copy.)
    h = h.reshape(G * N, D)                      # (GN, D)

    # --- SGC propagation: h <- A_hat^k h, one MXU GEMM per hop ----------------
    for _ in range(k):
        h = jnp.dot(a, h.astype(jnp.bfloat16),
                    preferred_element_type=jnp.float32)

    pv = pv_ref[...]                             # (5, D): b_c|gamma1|beta1|gamma2|beta2
    bc, g1, b1, g2, b2 = pv[0:1], pv[1:2], pv[2:3], pv[3:4], pv[4:5]

    # --- SGConv linear transform (single tall GEMM, bf16 operands) ------------
    h = jnp.dot(h.astype(jnp.bfloat16), wc_ref[...].astype(jnp.bfloat16),
                preferred_element_type=jnp.float32) + bc

    # --- SGConv internal LayerNorm (affine), single-pass variance -------------
    mu = jnp.mean(h, axis=-1, keepdims=True)
    var = jnp.mean(h * h, axis=-1, keepdims=True) - mu * mu
    h = (h - mu) * jax.lax.rsqrt(var + eps) * g1 + b1

    # --- middle_norm: LayerNorm (affine) --------------------------------------
    mu = jnp.mean(h, axis=-1, keepdims=True)
    var = jnp.mean(h * h, axis=-1, keepdims=True) - mu * mu
    h = (h - mu) * jax.lax.rsqrt(var + eps) * g2 + b2

    # --- activation (relu); dropout is identity (p=0) -------------------------
    h = jnp.maximum(h, 0.0)

    # --- GlobalPooling (mean over nodes; 1/N folded into W_p) + GraphPredict --
    g = jnp.sum(h.reshape(G, N, D), axis=1)                 # (G, D)
    out_ref[...] = (jnp.dot(g, wp_ref[...], preferred_element_type=jnp.float32)
                    + bp_ref[...]).astype(out_ref.dtype)


def _default_num_steps():
    """1 step for single-TC chips (v5e/v6e), 2 parallel steps on v7x (2 TCs)."""
    try:
        kind = jax.devices()[0].device_kind.lower()
    except Exception:  # pragma: no cover - defensive
        return 1
    if "v7" in kind or "7x" in kind or "tpu7" in kind:
        return 2
    return 1


def sgc_imdb_forward(a_hat, nfeat, params, *, num_layer, num_steps=None,
                     eps=1e-5):
    B, N, _ = a_hat.shape
    D = nfeat.shape[-1]
    O = params["wp"].shape[-1]

    assert N % 8 == 0, (
        "N must be a multiple of 8 (f32 sublane tile) so the in-kernel "
        "(G,N,D)->(G*N,D) reshape is a free relayout")

    if num_steps is None:
        num_steps = _default_num_steps()
    if B % num_steps != 0:
        num_steps = 1
    G = B // num_steps
    if G % 8 != 0 and G != B:       # output block second-minor dim constraint
        num_steps, G = 1, B
    S, GN = num_steps, G * N

    # Block-diagonal adjacency per grid step: (S, G*N, G*N).
    # a_bd[s, g*N + n, h*N + m] = a_hat[s*G + g, n, m] * (g == h)
    a_r = a_hat.reshape(S, G, N, N)
    a_bd = jnp.einsum("sgnm,gh->sgnhm", a_r,
                      jnp.eye(G, dtype=a_hat.dtype)).reshape(S, GN, GN)

    # Coalesce the five (1, D) per-feature parameter vectors into one array.
    pvec = jnp.concatenate([params["bc"], params["g1"], params["b1"],
                            params["g2"], params["b2"]], axis=0)   # (5, D)

    # Fold the mean-pooling 1/N into the predictor weights (one-time rescale).
    wp_scaled = params["wp"] * (1.0 / N)

    kernel = functools.partial(_sgc_imdb_kernel, k=num_layer, eps=eps)
    shared = lambda shape: pl.BlockSpec(shape, lambda i: (0,) * len(shape))

    return pl.pallas_call(
        kernel,
        out_shape=jax.ShapeDtypeStruct((B, O), jnp.float32),
        grid_spec=pltpu.PrefetchScalarGridSpec(
            num_scalar_prefetch=0,
            grid=(S,),
            in_specs=[
                pl.BlockSpec((1, GN, GN), lambda i: (i, 0, 0)),  # block-diag A_hat
                pl.BlockSpec((G, N, D), lambda i: (i, 0, 0)),    # nfeat block
                shared((D, D)),                                  # W_conv
                shared((5, D)),                                  # bc|g1|b1|g2|b2
                shared((D, O)),                                  # W_pred (pre-scaled)
                shared((1, O)),                                  # b_pred
            ],
            out_specs=pl.BlockSpec((G, O), lambda i: (i, 0)),
        ),
        compiler_params=pltpu.CompilerParams(
            dimension_semantics=("parallel",)),
    )(a_bd, nfeat, params["wc"], pvec, wp_scaled, params["bp"])


def _reference(a_hat, nfeat, params, *, num_layer, eps=1e-5):
    h = nfeat
    for _ in range(num_layer):
        h = jnp.einsum("bnm,bmd->bnd", a_hat, h)
    h = h @ params["wc"] + params["bc"]
    mu = h.mean(-1, keepdims=True); var = ((h - mu) ** 2).mean(-1, keepdims=True)
    h = (h - mu) / jnp.sqrt(var + eps) * params["g1"] + params["b1"]
    mu = h.mean(-1, keepdims=True); var = ((h - mu) ** 2).mean(-1, keepdims=True)
    h = (h - mu) / jnp.sqrt(var + eps) * params["g2"] + params["b2"]
    h = jnp.maximum(h, 0.0)
    g = h.mean(axis=1)
    return g @ params["wp"] + params["bp"]


def _normalize_adj(adj):
    """A_hat = D^{-1/2} (A + I) D^{-1/2}, batched."""
    B, N, _ = adj.shape
    a = adj + jnp.eye(N, dtype=adj.dtype)[None]
    deg = a.sum(-1)
    dinv = jax.lax.rsqrt(jnp.maximum(deg, 1e-12))
    return a * dinv[:, :, None] * dinv[:, None, :]


if __name__ == "__main__":
    B, N, D, O = 16, 16, 32, 4         # graphs, nodes, embed_dim, output_dim
    num_layer = 2

    key = jax.random.PRNGKey(0)
    k_adj, k_x, k_wc, k_bc, k_wp, k_bp, k_g1, k_g2 = jax.random.split(key, 8)

    # deterministic synthetic graph batch
    adj_raw = (jax.random.uniform(k_adj, (B, N, N)) > 0.7).astype(jnp.float32)
    adj = jnp.maximum(adj_raw, jnp.swapaxes(adj_raw, 1, 2))     # symmetric
    a_hat = _normalize_adj(adj)
    nfeat = jax.random.normal(k_x, (B, N, D), dtype=jnp.float32)

    # deterministic parameters (shapes implied by module __init__)
    params = {
        "wc": jax.random.normal(k_wc, (D, D), dtype=jnp.float32) * 0.1,
        "bc": jax.random.normal(k_bc, (1, D), dtype=jnp.float32) * 0.01,
        "g1": 1.0 + 0.1 * jax.random.normal(k_g1, (1, D), dtype=jnp.float32),
        "b1": jnp.zeros((1, D), jnp.float32),
        "g2": 1.0 + 0.1 * jax.random.normal(k_g2, (1, D), dtype=jnp.float32),
        "b2": jnp.zeros((1, D), jnp.float32),
        "wp": jax.random.normal(k_wp, (D, O), dtype=jnp.float32) * 0.1,
        "bp": jax.random.normal(k_bp, (1, O), dtype=jnp.float32) * 0.01,
    }

    out = sgc_imdb_forward(a_hat, nfeat, params, num_layer=num_layer)
    out = jax.block_until_ready(out)

    ref = _reference(a_hat, nfeat, params, num_layer=num_layer)
    assert out.shape == (B, O)
    # bf16 MXU operands on the propagation/SGConv GEMMs -> relaxed tolerance.
    assert jnp.allclose(out, ref, atol=3e-2, rtol=3e-2), (out, ref)

    print("KERNEL_OK")
</pallas_src>

<mosaic_0001>
module attributes {stable_mosaic.version = 11 : i64} {
  func.func @_sgc_imdb_kernel(%arg0: i32, %arg1: memref<1x256x256xf32, #tpu.memory_space<vmem>>, %arg2: memref<16x16x32xf32, #tpu.memory_space<vmem>>, %arg3: memref<32x32xf32, #tpu.memory_space<vmem>>, %arg4: memref<5x32xf32, #tpu.memory_space<vmem>>, %arg5: memref<32x4xf32, #tpu.memory_space<vmem>>, %arg6: memref<1x4xf32, #tpu.memory_space<vmem>>, %arg7: memref<16x4xf32, #tpu.memory_space<vmem>>) attributes {dimension_semantics = [#tpu.dimension_semantics<parallel>], iteration_bounds = array<i64: 1>, scalar_prefetch = 0 : i64, scratch_operands = 0 : i64, tpu.core_type = #tpu.core_type<tc>, window_params = [{transform_indices = @transform_0, window_bounds = array<i64: 1, 256, 256>}, {transform_indices = @transform_1, window_bounds = array<i64: 16, 16, 32>}, {pipeline_mode = #tpu.pipeline_mode<synchronous>, transform_indices = @transform_2, window_bounds = array<i64: 32, 32>}, {pipeline_mode = #tpu.pipeline_mode<synchronous>, transform_indices = @transform_3, window_bounds = array<i64: 5, 32>}, {pipeline_mode = #tpu.pipeline_mode<synchronous>, transform_indices = @transform_4, window_bounds = array<i64: 32, 4>}, {pipeline_mode = #tpu.pipeline_mode<synchronous>, transform_indices = @transform_5, window_bounds = array<i64: 1, 4>}, {transform_indices = @transform_6, window_bounds = array<i64: 16, 4>}]} {
    %c0 = arith.constant 0 : index
    %c0_0 = arith.constant 0 : index
    %c0_1 = arith.constant 0 : index
    %0 = vector.load %arg1[%c0, %c0_0, %c0_1] : memref<1x256x256xf32, #tpu.memory_space<vmem>>, vector<1x256x256xf32>
    %1 = vector.shape_cast %0 : vector<1x256x256xf32> to vector<256x256xf32>
    %2 = arith.truncf %1 : vector<256x256xf32> to vector<256x256xbf16>
    %c0_2 = arith.constant 0 : index
    %c0_3 = arith.constant 0 : index
    %c0_4 = arith.constant 0 : index
    %3 = vector.load %arg2[%c0_2, %c0_3, %c0_4] : memref<16x16x32xf32, #tpu.memory_space<vmem>>, vector<16x16x32xf32>
    %4 = vector.shape_cast %3 : vector<16x16x32xf32> to vector<256x32xf32>
    %5 = arith.truncf %4 : vector<256x32xf32> to vector<256x32xbf16>
    %cst = arith.constant dense<0.000000e+00> : vector<256x32xf32>
    %6 = tpu.matmul %2, %5, %cst {dimension_numbers = #tpu.dot_dimension_numbers<[1], [0], [0], [1], [0, 0, 1, 1], [], []>} : vector<256x256xbf16>, vector<256x32xbf16>, vector<256x32xf32> -> vector<256x32xf32>
    %7 = arith.truncf %6 : vector<256x32xf32> to vector<256x32xbf16>
    %cst_5 = arith.constant dense<0.000000e+00> : vector<256x32xf32>
    %8 = tpu.matmul %2, %7, %cst_5 {dimension_numbers = #tpu.dot_dimension_numbers<[1], [0], [0], [1], [0, 0, 1, 1], [], []>} : vector<256x256xbf16>, vector<256x32xbf16>, vector<256x32xf32> -> vector<256x32xf32>
    %c0_6 = arith.constant 0 : index
    %c0_7 = arith.constant 0 : index
    %9 = vector.load %arg4[%c0_6, %c0_7] : memref<5x32xf32, #tpu.memory_space<vmem>>, vector<5x32xf32>
    %10 = vector.extract_strided_slice %9 {offsets = [0, 0], sizes = [1, 32], strides = [1, 1]} : vector<5x32xf32> to vector<1x32xf32>
    %11 = vector.extract_strided_slice %9 {offsets = [1, 0], sizes = [1, 32], strides = [1, 1]} : vector<5x32xf32> to vector<1x32xf32>
    %12 = vector.extract_strided_slice %9 {offsets = [2, 0], sizes = [1, 32], strides = [1, 1]} : vector<5x32xf32> to vector<1x32xf32>
    %13 = vector.extract_strided_slice %9 {offsets = [3, 0], sizes = [1, 32], strides = [1, 1]} : vector<5x32xf32> to vector<1x32xf32>
    %14 = vector.extract_strided_slice %9 {offsets = [4, 0], sizes = [1, 32], strides = [1, 1]} : vector<5x32xf32> to vector<1x32xf32>
    %15 = arith.truncf %8 : vector<256x32xf32> to vector<256x32xbf16>
    %c0_8 = arith.constant 0 : index
    %c0_9 = arith.constant 0 : index
    %16 = vector.load %arg3[%c0_8, %c0_9] : memref<32x32xf32, #tpu.memory_space<vmem>>, vector<32x32xf32>
    %17 = arith.truncf %16 : vector<32x32xf32> to vector<32x32xbf16>
    %cst_10 = arith.constant dense<0.000000e+00> : vector<256x32xf32>
    %18 = tpu.matmul %15, %17, %cst_10 {dimension_numbers = #tpu.dot_dimension_numbers<[1], [0], [0], [1], [0, 0, 1, 1], [], []>} : vector<256x32xbf16>, vector<32x32xbf16>, vector<256x32xf32> -> vector<256x32xf32>
    %19 = vector.broadcast %10 : vector<1x32xf32> to vector<256x32xf32>
    %20 = arith.addf %18, %19 : vector<256x32xf32>
    %cst_11 = arith.constant dense<0.000000e+00> : vector<256xf32>
    %21 = vector.multi_reduction <add>, %20, %cst_11 [1] : vector<256x32xf32> to vector<256xf32>
    %22 = vector.shape_cast %21 : vector<256xf32> to vector<256x1xf32>
    %cst_12 = arith.constant 3.200000e+01 : f32
    %23 = vector.broadcast %cst_12 : f32 to vector<256x1xf32>
    %24 = arith.divf %22, %23 : vector<256x1xf32>
    %25 = arith.mulf %20, %20 : vector<256x32xf32>
    %cst_13 = arith.constant dense<0.000000e+00> : vector<256xf32>
    %26 = vector.multi_reduction <add>, %25, %cst_13 [1] : vector<256x32xf32> to vector<256xf32>
    %27 = vector.shape_cast %26 : vector<256xf32> to vector<256x1xf32>
    %cst_14 = arith.constant 3.200000e+01 : f32
    %28 = vector.broadcast %cst_14 : f32 to vector<256x1xf32>
    %29 = arith.divf %27, %28 : vector<256x1xf32>
    %30 = arith.mulf %24, %24 : vector<256x1xf32>
    %31 = arith.subf %29, %30 : vector<256x1xf32>
    %32 = vector.broadcast %24 : vector<256x1xf32> to vector<256x32xf32>
    %33 = arith.subf %20, %32 : vector<256x32xf32>
    %cst_15 = arith.constant 9.99999974E-6 : f32
    %34 = vector.broadcast %cst_15 : f32 to vector<256x1xf32>
    %35 = arith.addf %31, %34 : vector<256x1xf32>
    %36 = math.rsqrt %35 : vector<256x1xf32>
    %37 = vector.broadcast %36 : vector<256x1xf32> to vector<256x32xf32>
    %38 = arith.mulf %33, %37 : vector<256x32xf32>
    %39 = vector.broadcast %11 : vector<1x32xf32> to vector<256x32xf32>
    %40 = arith.mulf %38, %39 : vector<256x32xf32>
    %41 = vector.broadcast %12 : vector<1x32xf32> to vector<256x32xf32>
    %42 = arith.addf %40, %41 : vector<256x32xf32>
    %cst_16 = arith.constant dense<0.000000e+00> : vector<256xf32>
    %43 = vector.multi_reduction <add>, %42, %cst_16 [1] : vector<256x32xf32> to vector<256xf32>
    %44 = vector.shape_cast %43 : vector<256xf32> to vector<256x1xf32>
    %cst_17 = arith.constant 3.200000e+01 : f32
    %45 = vector.broadcast %cst_17 : f32 to vector<256x1xf32>
    %46 = arith.divf %44, %45 : vector<256x1xf32>
    %47 = arith.mulf %42, %42 : vector<256x32xf32>
    %cst_18 = arith.constant dense<0.000000e+00> : vector<256xf32>
    %48 = vector.multi_reduction <add>, %47, %cst_18 [1] : vector<256x32xf32> to vector<256xf32>
    %49 = vector.shape_cast %48 : vector<256xf32> to vector<256x1xf32>
    %cst_19 = arith.constant 3.200000e+01 : f32
    %50 = vector.broadcast %cst_19 : f32 to vector<256x1xf32>
    %51 = arith.divf %49, %50 : vector<256x1xf32>
    %52 = arith.mulf %46, %46 : vector<256x1xf32>
    %53 = arith.subf %51, %52 : vector<256x1xf32>
    %54 = vector.broadcast %46 : vector<256x1xf32> to vector<256x32xf32>
    %55 = arith.subf %42, %54 : vector<256x32xf32>
    %cst_20 = arith.constant 9.99999974E-6 : f32
    %56 = vector.broadcast %cst_20 : f32 to vector<256x1xf32>
    %57 = arith.addf %53, %56 : vector<256x1xf32>
    %58 = math.rsqrt %57 : vector<256x1xf32>
    %59 = vector.broadcast %58 : vector<256x1xf32> to vector<256x32xf32>
    %60 = arith.mulf %55, %59 : vector<256x32xf32>
    %61 = vector.broadcast %13 : vector<1x32xf32> to vector<256x32xf32>
    %62 = arith.mulf %60, %61 : vector<256x32xf32>
    %63 = vector.broadcast %14 : vector<1x32xf32> to vector<256x32xf32>
    %64 = arith.addf %62, %63 : vector<256x32xf32>
    %cst_21 = arith.constant 0.000000e+00 : f32
    %65 = vector.broadcast %cst_21 : f32 to vector<256x32xf32>
    %66 = arith.maximumf %64, %65 : vector<256x32xf32>
    %67 = vector.shape_cast %66 : vector<256x32xf32> to vector<16x16x32xf32>
    %cst_22 = arith.constant dense<0.000000e+00> : vector<16x32xf32>
    %68 = vector.multi_reduction <add>, %67, %cst_22 [1] : vector<16x16x32xf32> to vector<16x32xf32>
    %c0_23 = arith.constant 0 : index
    %c0_24 = arith.constant 0 : index
    %69 = vector.load %arg5[%c0_23, %c0_24] : memref<32x4xf32, #tpu.memory_space<vmem>>, vector<32x4xf32>
    %cst_25 = arith.constant dense<0.000000e+00> : vector<16x4xf32>
    %70 = tpu.matmul %68, %69, %cst_25 {dimension_numbers = #tpu.dot_dimension_numbers<[1], [0], [0], [1], [0, 0, 1, 1], [], []>} : vector<16x32xf32>, vector<32x4xf32>, vector<16x4xf32> -> vector<16x4xf32>
    %c0_26 = arith.constant 0 : index
    %c0_27 = arith.constant 0 : index
    %71 = vector.load %arg6[%c0_26, %c0_27] : memref<1x4xf32, #tpu.memory_space<vmem>>, vector<1x4xf32>
    %72 = vector.broadcast %71 : vector<1x4xf32> to vector<16x4xf32>
    %73 = arith.addf %70, %72 : vector<16x4xf32>
    %c0_28 = arith.constant 0 : index
    %c0_29 = arith.constant 0 : index
    %74 = vector.load %arg7[%c0_28, %c0_29] : memref<16x4xf32, #tpu.memory_space<vmem>>, vector<16x4xf32>
    tpu.vector_store %arg7[%c0_28, %c0_29], %73 {strides = array<i32>} : memref<16x4xf32, #tpu.memory_space<vmem>>, vector<16x4xf32>,
    return
  }
  func.func @transform_0(%arg0: i32) -> (i32, i32, i32) {
    %c0_i32 = arith.constant 0 : i32
    %c0_i32_0 = arith.constant 0 : i32
    %c0_i32_1 = arith.constant 0 : i32
    return %arg0, %c0_i32, %c0_i32_0 : i32, i32, i32
  }
  func.func @transform_1(%arg0: i32) -> (i32, i32, i32) {
    %c0_i32 = arith.constant 0 : i32
    %c0_i32_0 = arith.constant 0 : i32
    %c0_i32_1 = arith.constant 0 : i32
    return %arg0, %c0_i32, %c0_i32_0 : i32, i32, i32
  }
  func.func @transform_2(%arg0: i32) -> (i32, i32) {
    %c0_i32 = arith.constant 0 : i32
    %c0_i32_0 = arith.constant 0 : i32
    %c0_i32_1 = arith.constant 0 : i32
    return %c0_i32, %c0_i32_0 : i32, i32
  }
  func.func @transform_3(%arg0: i32) -> (i32, i32) {
    %c0_i32 = arith.constant 0 : i32
    %c0_i32_0 = arith.constant 0 : i32
    %c0_i32_1 = arith.constant 0 : i32
    return %c0_i32, %c0_i32_0 : i32, i32
  }
  func.func @transform_4(%arg0: i32) -> (i32, i32) {
    %c0_i32 = arith.constant 0 : i32
    %c0_i32_0 = arith.constant 0 : i32
    %c0_i32_1 = arith.constant 0 : i32
    return %c0_i32, %c0_i32_0 : i32, i32
  }
  func.func @transform_5(%arg0: i32) -> (i32, i32) {
    %c0_i32 = arith.constant 0 : i32
    %c0_i32_0 = arith.constant 0 : i32
    %c0_i32_1 = arith.constant 0 : i32
    return %c0_i32, %c0_i32_0 : i32, i32
  }
  func.func @transform_6(%arg0: i32) -> (i32, i32) {
    %c0_i32 = arith.constant 0 : i32
    %c0_i32_0 = arith.constant 0 : i32
    return %arg0, %c0_i32 : i32, i32
  }
}

</mosaic_0001>

<llo_original>
// kernel: tpu_custom_call.1
$region0: #{tpu_custom_call.1}
  #allocation0 [shape = 'u32[]', space=smem, size = 0x4, offset = 0x4, fixed_abs, tag = 'smem constant byte address 0x4 - core index']
  #allocation1 [shape = 'u32[144,128]{1,0:T(1,128)}', space=vmem, size = 0x12000, scoped, tag = 'internal scratch']
  %s0 = inlined_call_operand.hbm [shape: f32[1,256,256], index: 0, kind: input, shape index: {}]
  %s1 = inlined_call_operand.hbm [shape: f32[16,16,32], index: 1, kind: input, shape index: {}]
  %s2 = inlined_call_operand.vmem [shape: f32[32,32], index: 2, kind: input, shape index: {}]
  %s3 = inlined_call_operand.vmem [shape: f32[5,32], index: 3, kind: input, shape index: {}]
  %s4 = inlined_call_operand.vmem [shape: f32[32,4], index: 4, kind: input, shape index: {}]
  %s5 = inlined_call_operand.vmem [shape: f32[1,4], index: 5, kind: input, shape index: {}]
  %s6 = inlined_call_operand.vmem [shape: f32[16,4], index: 6, kind: output, shape index: {}]
  %s7 = sld [smem:[#allocation0]]
  $region42: #{tpu_custom_call.1} parent=0
    _
  %s9 = ssub.s32 1, %s7
  %s10 = scalar_select 0, %s9, %s7
  $region1: #{tpu_custom_call.1} parent=0
    #allocation2 [shape = 'u8[262144]{0}', space=vmem, size = 0x40000, scoped, tag = 'input window, operand 0, single buffered']
    #allocation3 [shape = 's32[1]{0}', space=sflag, size = 0x4, scoped, tag = 'scoped memory for tpu_custom_call.1']
    #allocation4 [shape = 'u8[131072]{0}', space=vmem, size = 0x20000, scoped, tag = 'input window, operand 1, single buffered']
    #allocation5 [shape = 's32[1]{0}', space=sflag, size = 0x4, scoped, tag = 'scoped memory for tpu_custom_call.1']
    %11 = vsyncpa [#allocation3], 0
    %12 = vsyncpa [#allocation5], 0
    // Predicated region
    $region2: #{tpu_custom_call.1} parent=1 // pred_check
      _
    $region3: #{tpu_custom_call.1} parent=1 // pred_check_branch
      %14 = sbr.rel (0) target = $region5
    $region4: #{tpu_custom_call.1} parent=1 // pred_region
      %s16 = ssub.s32 8192, 8192
      %17 = vsyncadd [#allocation3], %s16
      %s18 = sshll.u32 [#allocation2], 4
      %s19 = int_to_ptr.vmem [resolvable:$true] %s18
      %24 = dma.hbm_to_vmem [thread:$0]  %s0, 8192, %s19, [#allocation3], 256, 256, 16
    $region5: #{tpu_custom_call.1} parent=1 // pred_fallthru
      _
    // Predicated region
    $region6: #{tpu_custom_call.1} parent=1 // pred_check
      _
    $region7: #{tpu_custom_call.1} parent=1 // pred_check_branch
      %26 = sbr.rel (0) target = $region9
    $region8: #{tpu_custom_call.1} parent=1 // pred_region
      %s28 = ssub.s32 4096, 4096
      %29 = vsyncadd [#allocation5], %s28
      %s30 = sshll.u32 [#allocation4], 4
      %s31 = int_to_ptr.vmem [resolvable:$true] %s30
      %36 = dma.hbm_to_vmem [thread:$0]  %s1, 4096, %s31, [#allocation5], 128, 128, 8
    $region9: #{tpu_custom_call.1} parent=1 // pred_fallthru
      _
    // Predicated region
    $region10: #{tpu_custom_call.1} parent=1 // pred_check
      _
    $region11: #{tpu_custom_call.1} parent=1 // pred_check_branch
      %38 = sbr.rel (0) target = $region13
    $region12: #{tpu_custom_call.1} parent=1 // pred_region
      _
    $region13: #{tpu_custom_call.1} parent=1 // pred_fallthru
      _
    // Predicated region
    $region14: #{tpu_custom_call.1} parent=1 // pred_check
      _
    $region15: #{tpu_custom_call.1} parent=1 // pred_check_branch
      %40 = sbr.rel (0) target = $region17
    $region16: #{tpu_custom_call.1} parent=1 // pred_region
      _
    $region17: #{tpu_custom_call.1} parent=1 // pred_fallthru
      _
    // Predicated region
    $region18: #{tpu_custom_call.1} parent=1 // pred_check
      _
    $region19: #{tpu_custom_call.1} parent=1 // pred_check_branch
      %42 = sbr.rel (0) target = $region21
    $region20: #{tpu_custom_call.1} parent=1 // pred_region
      _
    $region21: #{tpu_custom_call.1} parent=1 // pred_fallthru
      _
    // Predicated region
    $region22: #{tpu_custom_call.1} parent=1 // pred_check
      _
    $region23: #{tpu_custom_call.1} parent=1 // pred_check_branch
      %44 = sbr.rel (0) target = $region25
    $region24: #{tpu_custom_call.1} parent=1 // pred_region
      _
    $region25: #{tpu_custom_call.1} parent=1 // pred_fallthru
      _
    // Predicated region
    $region26: #{tpu_custom_call.1} parent=1 // pred_check
      _
    $region27: #{tpu_custom_call.1} parent=1 // pred_check_branch
      %46 = sbr.rel (0) target = $region29
    $region28: #{tpu_custom_call.1} parent=1 // pred_region
      %47 = dma.done [#allocation3], 8192
    $region29: #{tpu_custom_call.1} parent=1 // pred_fallthru
      _
    // Predicated region
    $region30: #{tpu_custom_call.1} parent=1 // pred_check
      _
    $region31: #{tpu_custom_call.1} parent=1 // pred_check_branch
      %49 = sbr.rel (0) target = $region33
    $region32: #{tpu_custom_call.1} parent=1 // pred_region
      %50 = dma.done [#allocation5], 4096
    $region33: #{tpu_custom_call.1} parent=1 // pred_fallthru
      _
    %v52 = vld [vmem:[#allocation2] sm:$0xff]
    %v53 = vld [vmem:[#allocation2 + $0x8] sm:$0xff]
    %v54 = vld [vmem:[#allocation2 + $0x10] sm:$0xff]
    %v55 = vld [vmem:[#allocation2 + $0x18] sm:$0xff]
    %v56 = vld [vmem:[#allocation2 + $0x20] sm:$0xff]
    %v57 = vld [vmem:[#allocation2 + $0x28] sm:$0xff]
    %v58 = vld [vmem:[#allocation2 + $0x30] sm:$0xff]
    %v59 = vld [vmem:[#allocation2 + $0x38] sm:$0xff]
    %v60 = vld [vmem:[#allocation2 + $0x40] sm:$0xff]
    %v61 = vld [vmem:[#allocation2 + $0x48] sm:$0xff]
    %v62 = vld [vmem:[#allocation2 + $0x50] sm:$0xff]
    %v63 = vld [vmem:[#allocation2 + $0x58] sm:$0xff]
    %v64 = vld [vmem:[#allocation2 + $0x60] sm:$0xff]
    %v65 = vld [vmem:[#allocation2 + $0x68] sm:$0xff]
    %v66 = vld [vmem:[#allocation2 + $0x70] sm:$0xff]
    %v67 = vld [vmem:[#allocation2 + $0x78] sm:$0xff]
    %v68 = vld [vmem:[#allocation2 + $0x80] sm:$0xff]
    %v69 = vld [vmem:[#allocation2 + $0x88] sm:$0xff]
    %v70 = vld [vmem:[#allocation2 + $0x90] sm:$0xff]
    %v71 = vld [vmem:[#allocation2 + $0x98] sm:$0xff]
    %v72 = vld [vmem:[#allocation2 + $0xa0] sm:$0xff]
    %v73 = vld [vmem:[#allocation2 + $0xa8] sm:$0xff]
    %v74 = vld [vmem:[#allocation2 + $0xb0] sm:$0xff]
    %v75 = vld [vmem:[#allocation2 + $0xb8] sm:$0xff]
    %v76 = vld [vmem:[#allocation2 + $0xc0] sm:$0xff]
    %v77 = vld [vmem:[#allocation2 + $0xc8] sm:$0xff]
    %v78 = vld [vmem:[#allocation2 + $0xd0] sm:$0xff]
    %v79 = vld [vmem:[#allocation2 + $0xd8] sm:$0xff]
    %v80 = vld [vmem:[#allocation2 + $0xe0] sm:$0xff]
    %v81 = vld [vmem:[#allocation2 + $0xe8] sm:$0xff]
    %v82 = vld [vmem:[#allocation2 + $0xf0] sm:$0xff]
    %v83 = vld [vmem:[#allocation2 + $0xf8] sm:$0xff]
    %v84 = vld [vmem:[#allocation2 + $0x100] sm:$0xff]
    %v85 = vld [vmem:[#allocation2 + $0x108] sm:$0xff]
    %v86 = vld [vmem:[#allocation2 + $0x110] sm:$0xff]
    %v87 = vld [vmem:[#allocation2 + $0x118] sm:$0xff]
    %v88 = vld [vmem:[#allocation2 + $0x120] sm:$0xff]
    %v89 = vld [vmem:[#allocation2 + $0x128] sm:$0xff]
    %v90 = vld [vmem:[#allocation2 + $0x130] sm:$0xff]
    %v91 = vld [vmem:[#allocation2 + $0x138] sm:$0xff]
    %v92 = vld [vmem:[#allocation2 + $0x140] sm:$0xff]
    %v93 = vld [vmem:[#allocation2 + $0x148] sm:$0xff]
    %v94 = vld [vmem:[#allocation2 + $0x150] sm:$0xff]
    %v95 = vld [vmem:[#allocation2 + $0x158] sm:$0xff]
    %v96 = vld [vmem:[#allocation2 + $0x160] sm:$0xff]
    %v97 = vld [vmem:[#allocation2 + $0x168] sm:$0xff]
    %v98 = vld [vmem:[#allocation2 + $0x170] sm:$0xff]
    %v99 = vld [vmem:[#allocation2 + $0x178] sm:$0xff]
    %v100 = vld [vmem:[#allocation2 + $0x180] sm:$0xff]
    %v101 = vld [vmem:[#allocation2 + $0x188] sm:$0xff]
    %v102 = vld [vmem:[#allocation2 + $0x190] sm:$0xff]
    %v103 = vld [vmem:[#allocation2 + $0x198] sm:$0xff]
    %v104 = vld [vmem:[#allocation2 + $0x1a0] sm:$0xff]
    %v105 = vld [vmem:[#allocation2 + $0x1a8] sm:$0xff]
    %v106 = vld [vmem:[#allocation2 + $0x1b0] sm:$0xff]
    %v107 = vld [vmem:[#allocation2 + $0x1b8] sm:$0xff]
    %v108 = vld [vmem:[#allocation2 + $0x1c0] sm:$0xff]
    %v109 = vld [vmem:[#allocation2 + $0x1c8] sm:$0xff]
    %v110 = vld [vmem:[#allocation2 + $0x1d0] sm:$0xff]
    %v111 = vld [vmem:[#allocation2 + $0x1d8] sm:$0xff]
    %v112 = vld [vmem:[#allocation2 + $0x1e0] sm:$0xff]
    %v113 = vld [vmem:[#allocation2 + $0x1e8] sm:$0xff]
    %v114 = vld [vmem:[#allocation2 + $0x1f0] sm:$0xff]
    %v115 = vld [vmem:[#allocation2 + $0x1f8] sm:$0xff]
    %v116 = vpack.c.bf16 %v54, %v52
    %v117 = vpack.c.bf16 %v55, %v53
    %v118 = vpack.c.bf16 %v58, %v56
    %v119 = vpack.c.bf16 %v59, %v57
    %v120 = vpack.c.bf16 %v62, %v60
    %v121 = vpack.c.bf16 %v63, %v61
    %v122 = vpack.c.bf16 %v66, %v64
    %v123 = vpack.c.bf16 %v67, %v65
    %v124 = vpack.c.bf16 %v70, %v68
    %v125 = vpack.c.bf16 %v71, %v69
    %v126 = vpack.c.bf16 %v74, %v72
    %v127 = vpack.c.bf16 %v75, %v73
    %v128 = vpack.c.bf16 %v78, %v76
    %v129 = vpack.c.bf16 %v79, %v77
    %v130 = vpack.c.bf16 %v82, %v80
    %v131 = vpack.c.bf16 %v83, %v81
    %v132 = vpack.c.bf16 %v86, %v84
    %v133 = vpack.c.bf16 %v87, %v85
    %v134 = vpack.c.bf16 %v90, %v88
    %v135 = vpack.c.bf16 %v91, %v89
    %v136 = vpack.c.bf16 %v94, %v92
    %v137 = vpack.c.bf16 %v95, %v93
    %v138 = vpack.c.bf16 %v98, %v96
    %v139 = vpack.c.bf16 %v99, %v97
    %v140 = vpack.c.bf16 %v102, %v100
    %v141 = vpack.c.bf16 %v103, %v101
    %v142 = vpack.c.bf16 %v106, %v104
    %v143 = vpack.c.bf16 %v107, %v105
    %v144 = vpack.c.bf16 %v110, %v108
    %v145 = vpack.c.bf16 %v111, %v109
    %v146 = vpack.c.bf16 %v114, %v112
    %v147 = vpack.c.bf16 %v115, %v113
    %v148 = vld [vmem:[#allocation4] sm:$0xff]
    %v149 = vld [vmem:[#allocation4 + $0x8] sm:$0xff]
    %v150 = vld [vmem:[#allocation4 + $0x10] sm:$0xff]
    %v151 = vld [vmem:[#allocation4 + $0x18] sm:$0xff]
    %v152 = vld [vmem:[#allocation4 + $0x20] sm:$0xff]
    %v153 = vld [vmem:[#allocation4 + $0x28] sm:$0xff]
    %v154 = vld [vmem:[#allocation4 + $0x30] sm:$0xff]
    %v155 = vld [vmem:[#allocation4 + $0x38] sm:$0xff]
    %v156 = vld [vmem:[#allocation4 + $0x40] sm:$0xff]
    %v157 = vld [vmem:[#allocation4 + $0x48] sm:$0xff]
    %v158 = vld [vmem:[#allocation4 + $0x50] sm:$0xff]
    %v159 = vld [vmem:[#allocation4 + $0x58] sm:$0xff]
    %v160 = vld [vmem:[#allocation4 + $0x60] sm:$0xff]
    %v161 = vld [vmem:[#allocation4 + $0x68] sm:$0xff]
    %v162 = vld [vmem:[#allocation4 + $0x70] sm:$0xff]
    %v163 = vld [vmem:[#allocation4 + $0x78] sm:$0xff]
    %v164 = vld [vmem:[#allocation4 + $0x80] sm:$0xff]
    %v165 = vld [vmem:[#allocation4 + $0x88] sm:$0xff]
    %v166 = vld [vmem:[#allocation4 + $0x90] sm:$0xff]
    %v167 = vld [vmem:[#allocation4 + $0x98] sm:$0xff]
    %v168 = vld [vmem:[#allocation4 + $0xa0] sm:$0xff]
    %v169 = vld [vmem:[#allocation4 + $0xa8] sm:$0xff]
    %v170 = vld [vmem:[#allocation4 + $0xb0] sm:$0xff]
    %v171 = vld [vmem:[#allocation4 + $0xb8] sm:$0xff]
    %v172 = vld [vmem:[#allocation4 + $0xc0] sm:$0xff]
    %v173 = vld [vmem:[#allocation4 + $0xc8] sm:$0xff]
    %v174 = vld [vmem:[#allocation4 + $0xd0] sm:$0xff]
    %v175 = vld [vmem:[#allocation4 + $0xd8] sm:$0xff]
    %v176 = vld [vmem:[#allocation4 + $0xe0] sm:$0xff]
    %v177 = vld [vmem:[#allocation4 + $0xe8] sm:$0xff]
    %v178 = vld [vmem:[#allocation4 + $0xf0] sm:$0xff]
    %v179 = vld [vmem:[#allocation4 + $0xf8] sm:$0xff]
    %v180 = vpack.c.bf16 %v149, %v148
    %v181 = vpack.c.bf16 %v151, %v150
    %v182 = vpack.c.bf16 %v153, %v152
    %v183 = vpack.c.bf16 %v155, %v154
    %v184 = vpack.c.bf16 %v157, %v156
    %v185 = vpack.c.bf16 %v159, %v158
    %v186 = vpack.c.bf16 %v161, %v160
    %v187 = vpack.c.bf16 %v163, %v162
    %v188 = vpack.c.bf16 %v165, %v164
    %v189 = vpack.c.bf16 %v167, %v166
    %v190 = vpack.c.bf16 %v169, %v168
    %v191 = vpack.c.bf16 %v171, %v170
    %v192 = vpack.c.bf16 %v173, %v172
    %v193 = vpack.c.bf16 %v175, %v174
    %v194 = vpack.c.bf16 %v177, %v176
    %v195 = vpack.c.bf16 %v179, %v178
    %196 = vmatprep.subr.bf16.mxu0 0
    %197 = vmatpush1.bf16.msra.mxu0 %v187
    %198 = vmatprep.subr.bf16.mxu0 0
    %199 = vmatpush1.bf16.msra.mxu0 %v186
    %200 = vmatprep.subr.bf16.mxu0 0
    %201 = vmatpush1.bf16.msra.mxu0 %v185
    %202 = vmatprep.subr.bf16.mxu0 0
    %203 = vmatpush1.bf16.msra.mxu0 %v184
    %204 = vmatprep.subr.bf16.mxu0 0
    %205 = vmatpush1.bf16.msra.mxu0 %v183
    %206 = vmatprep.subr.bf16.mxu0 0
    %207 = vmatpush1.bf16.msra.mxu0 %v182
    %208 = vmatprep.subr.bf16.mxu0 0
    %209 = vmatpush1.bf16.msra.mxu0 %v181
    %210 = vmatprep.subr.bf16.mxu0 0
    %211 = vmatpush1.bf16.msra.mxu0 %v180
    %212 = vmatprep.subr.bf16.mxu0 0
    %213 = vmatpush2.bf16.msra.mxu0 %v195
    %214 = vmatprep.subr.bf16.mxu0 0
    %215 = vmatpush2.bf16.msra.mxu0 %v194
    %216 = vmatprep.subr.bf16.mxu0 0
    %217 = vmatpush2.bf16.msra.mxu0 %v193
    %218 = vmatprep.subr.bf16.mxu0 0
    %219 = vmatpush2.bf16.msra.mxu0 %v192
    %220 = vmatprep.subr.bf16.mxu0 0
    %221 = vmatpush2.bf16.msra.mxu0 %v191
    %222 = vmatprep.subr.bf16.mxu0 0
    %223 = vmatpush2.bf16.msra.mxu0 %v190
    %224 = vmatprep.subr.bf16.mxu0 0
    %225 = vmatpush2.bf16.msra.mxu0 %v189
    %226 = vmatprep.subr.bf16.mxu0 0
    %227 = vmatpush2.bf16.msra.mxu0 %v188
    %228 = vmatprep.mubr.bf16.mxu0 %v117
    %229 = vmatmul.mubr.bf16.gmra.mxu0 %v116
    %v230 = vpop.f32.mrf.mxu0
    %v231 = vadd.f32 0.0, %v230
    %v232 = vpop.f32.mrf.mxu0
    %v233 = vpop.f32.mrf.mxu0
    %v234 = vadd.f32 0.0, %v233
    %v235 = vpop.f32.mrf.mxu0
    %236 = vmatprep.mubr.bf16.mxu0 %v119
    %237 = vmatmul.mubr.bf16.gmra.mxu0 %v118
    %v238 = vpop.f32.mrf.mxu0
    %v239 = vadd.f32 0.0, %v238
    %v240 = vpop.f32.mrf.mxu0
    %v241 = vpop.f32.mrf.mxu0
    %v242 = vadd.f32 0.0, %v241
    %v243 = vpop.f32.mrf.mxu0
    %244 = vmatprep.mubr.bf16.mxu0 %v121
    %245 = vmatmul.mubr.bf16.gmra.mxu0 %v120
    %v246 = vpop.f32.mrf.mxu0
    %v247 = vadd.f32 0.0, %v246
    %v248 = vpop.f32.mrf.mxu0
    %v249 = vpop.f32.mrf.mxu0
    %v250 = vadd.f32 0.0, %v249
    %v251 = vpop.f32.mrf.mxu0
    %252 = vmatprep.mubr.bf16.mxu0 %v123
    %253 = vmatmul.mubr.bf16.gmra.mxu0 %v122
    %v254 = vpop.f32.mrf.mxu0
    %v255 = vadd.f32 0.0, %v254
    %v256 = vpop.f32.mrf.mxu0
    %v257 = vpop.f32.mrf.mxu0
    %v258 = vadd.f32 0.0, %v257
    %v259 = vpop.f32.mrf.mxu0
    %260 = vmatprep.mubr.bf16.mxu0 %v125
    %261 = vmatmul.mubr.bf16.gmra.mxu0 %v124
    %v262 = vpop.f32.mrf.mxu0
    %v263 = vadd.f32 0.0, %v262
    %v264 = vpop.f32.mrf.mxu0
    %v265 = vpop.f32.mrf.mxu0
    %v266 = vadd.f32 0.0, %v265
    %v267 = vpop.f32.mrf.mxu0
    %268 = vmatprep.mubr.bf16.mxu0 %v127
    %269 = vmatmul.mubr.bf16.gmra.mxu0 %v126
    %v270 = vpop.f32.mrf.mxu0
    %v271 = vadd.f32 0.0, %v270
    %v272 = vpop.f32.mrf.mxu0
    %v273 = vpop.f32.mrf.mxu0
    %v274 = vadd.f32 0.0, %v273
    %v275 = vpop.f32.mrf.mxu0
    %276 = vmatprep.mubr.bf16.mxu0 %v129
    %277 = vmatmul.mubr.bf16.gmra.mxu0 %v128
    %v278 = vpop.f32.mrf.mxu0
    %v279 = vadd.f32 0.0, %v278
    %v280 = vpop.f32.mrf.mxu0
    %v281 = vpop.f32.mrf.mxu0
    %v282 = vadd.f32 0.0, %v281
    %v283 = vpop.f32.mrf.mxu0
    %284 = vmatprep.mubr.bf16.mxu0 %v131
    %285 = vmatmul.mubr.bf16.gmra.mxu0 %v130
    %v286 = vpop.f32.mrf.mxu0
    %v287 = vadd.f32 0.0, %v286
    %v288 = vpop.f32.mrf.mxu0
    %v289 = vpop.f32.mrf.mxu0
    %v290 = vadd.f32 0.0, %v289
    %v291 = vpop.f32.mrf.mxu0
    %292 = vmatprep.mubr.bf16.mxu0 %v133
    %293 = vmatmul.mubr.bf16.gmra.mxu0 %v132
    %v294 = vpop.f32.mrf.mxu0
    %v295 = vadd.f32 0.0, %v294
    %v296 = vpop.f32.mrf.mxu0
    %v297 = vpop.f32.mrf.mxu0
    %v298 = vadd.f32 0.0, %v297
    %v299 = vpop.f32.mrf.mxu0
    %300 = vmatprep.mubr.bf16.mxu0 %v135
    %301 = vmatmul.mubr.bf16.gmra.mxu0 %v134
    %v302 = vpop.f32.mrf.mxu0
    %v303 = vadd.f32 0.0, %v302
    %v304 = vpop.f32.mrf.mxu0
    %v305 = vpop.f32.mrf.mxu0
    %v306 = vadd.f32 0.0, %v305
    %v307 = vpop.f32.mrf.mxu0
    %308 = vmatprep.mubr.bf16.mxu0 %v137
    %309 = vmatmul.mubr.bf16.gmra.mxu0 %v136
    %v310 = vpop.f32.mrf.mxu0
    %v311 = vadd.f32 0.0, %v310
    %v312 = vpop.f32.mrf.mxu0
    %v313 = vpop.f32.mrf.mxu0
    %v314 = vadd.f32 0.0, %v313
    %v315 = vpop.f32.mrf.mxu0
    %316 = vmatprep.mubr.bf16.mxu0 %v139
    %317 = vmatmul.mubr.bf16.gmra.mxu0 %v138
    %v318 = vpop.f32.mrf.mxu0
    %v319 = vadd.f32 0.0, %v318
    %v320 = vpop.f32.mrf.mxu0
    %v321 = vpop.f32.mrf.mxu0
    %v322 = vadd.f32 0.0, %v321
    %v323 = vpop.f32.mrf.mxu0
    %324 = vmatprep.mubr.bf16.mxu0 %v141
    %325 = vmatmul.mubr.bf16.gmra.mxu0 %v140
    %v326 = vpop.f32.mrf.mxu0
    %v327 = vadd.f32 0.0, %v326
    %v328 = vpop.f32.mrf.mxu0
    %v329 = vpop.f32.mrf.mxu0
    %v330 = vadd.f32 0.0, %v329
    %v331 = vpop.f32.mrf.mxu0
    %332 = vmatprep.mubr.bf16.mxu0 %v143
    %333 = vmatmul.mubr.bf16.gmra.mxu0 %v142
    %v334 = vpop.f32.mrf.mxu0
    %v335 = vadd.f32 0.0, %v334
    %v336 = vpop.f32.mrf.mxu0
    %v337 = vpop.f32.mrf.mxu0
    %v338 = vadd.f32 0.0, %v337
    %v339 = vpop.f32.mrf.mxu0
    %340 = vmatprep.mubr.bf16.mxu0 %v145
    %341 = vmatmul.mubr.bf16.gmra.mxu0 %v144
    %v342 = vpop.f32.mrf.mxu0
    %v343 = vadd.f32 0.0, %v342
    %v344 = vpop.f32.mrf.mxu0
    %v345 = vpop.f32.mrf.mxu0
    %v346 = vadd.f32 0.0, %v345
    %v347 = vpop.f32.mrf.mxu0
    %348 = vmatprep.mubr.bf16.mxu0 %v147
    %349 = vmatmul.mubr.bf16.gmra.mxu0 %v146
    %v350 = vpop.f32.mrf.mxu0
    %v351 = vadd.f32 0.0, %v350
    %v352 = vpop.f32.mrf.mxu0
    %v353 = vpop.f32.mrf.mxu0
    %v354 = vadd.f32 0.0, %v353
    %v355 = vpop.f32.mrf.mxu0
    %356 = vdwg.mxu0
    %v357 = vpack.c.bf16 %v234, %v231
    %v358 = vpack.c.bf16 %v242, %v239
    %v359 = vpack.c.bf16 %v250, %v247
    %v360 = vpack.c.bf16 %v258, %v255
    %v361 = vpack.c.bf16 %v266, %v263
    %v362 = vpack.c.bf16 %v274, %v271
    %v363 = vpack.c.bf16 %v282, %v279
    %v364 = vpack.c.bf16 %v290, %v287
    %v365 = vpack.c.bf16 %v298, %v295
    %v366 = vpack.c.bf16 %v306, %v303
    %v367 = vpack.c.bf16 %v314, %v311
    %v368 = vpack.c.bf16 %v322, %v319
    %v369 = vpack.c.bf16 %v330, %v327
    %v370 = vpack.c.bf16 %v338, %v335
    %v371 = vpack.c.bf16 %v346, %v343
    %v372 = vpack.c.bf16 %v354, %v351
    %373 = vmatprep.subr.bf16.mxu0 0
    %374 = vmatpush1.bf16.msra.mxu0 %v364
    %375 = vmatprep.subr.bf16.mxu0 0
    %376 = vmatpush1.bf16.msra.mxu0 %v363
    %377 = vmatprep.subr.bf16.mxu0 0
    %378 = vmatpush1.bf16.msra.mxu0 %v362
    %379 = vmatprep.subr.bf16.mxu0 0
    %380 = vmatpush1.bf16.msra.mxu0 %v361
    %381 = vmatprep.subr.bf16.mxu0 0
    %382 = vmatpush1.bf16.msra.mxu0 %v360
    %383 = vmatprep.subr.bf16.mxu0 0
    %384 = vmatpush1.bf16.msra.mxu0 %v359
    %385 = vmatprep.subr.bf16.mxu0 0
    %386 = vmatpush1.bf16.msra.mxu0 %v358
    %387 = vmatprep.subr.bf16.mxu0 0
    %388 = vmatpush1.bf16.msra.mxu0 %v357
    %389 = vmatprep.subr.bf16.mxu0 0
    %390 = vmatpush2.bf16.msra.mxu0 %v372
    %391 = vmatprep.subr.bf16.mxu0 0
    %392 = vmatpush2.bf16.msra.mxu0 %v371
    %393 = vmatprep.subr.bf16.mxu0 0
    %394 = vmatpush2.bf16.msra.mxu0 %v370
    %395 = vmatprep.subr.bf16.mxu0 0
    %396 = vmatpush2.bf16.msra.mxu0 %v369
    %397 = vmatprep.subr.bf16.mxu0 0
    %398 = vmatpush2.bf16.msra.mxu0 %v368
    %399 = vmatprep.subr.bf16.mxu0 0
    %400 = vmatpush2.bf16.msra.mxu0 %v367
    %401 = vmatprep.subr.bf16.mxu0 0
    %402 = vmatpush2.bf16.msra.mxu0 %v366
    %403 = vmatprep.subr.bf16.mxu0 0
    %404 = vmatpush2.bf16.msra.mxu0 %v365
    %405 = vmatprep.mubr.bf16.mxu0 %v117
    %406 = vmatmul.mubr.bf16.gmra.mxu0 %v116
    %v407 = vpop.f32.mrf.mxu0
    %v408 = vadd.f32 0.0, %v407
    %v409 = vpop.f32.mrf.mxu0
    %v410 = vpop.f32.mrf.mxu0
    %v411 = vadd.f32 0.0, %v410
    %v412 = vpop.f32.mrf.mxu0
    %413 = vmatprep.mubr.bf16.mxu0 %v119
    %414 = vmatmul.mubr.bf16.gmra.mxu0 %v118
    %v415 = vpop.f32.mrf.mxu0
    %v416 = vadd.f32 0.0, %v415
    %v417 = vpop.f32.mrf.mxu0
    %v418 = vpop.f32.mrf.mxu0
    %v419 = vadd.f32 0.0, %v418
    %v420 = vpop.f32.mrf.mxu0
    %421 = vmatprep.mubr.bf16.mxu0 %v121
    %422 = vmatmul.mubr.bf16.gmra.mxu0 %v120
    %v423 = vpop.f32.mrf.mxu0
    %v424 = vadd.f32 0.0, %v423
    %v425 = vpop.f32.mrf.mxu0
    %v426 = vpop.f32.mrf.mxu0
    %v427 = vadd.f32 0.0, %v426
    %v428 = vpop.f32.mrf.mxu0
    %429 = vmatprep.mubr.bf16.mxu0 %v123
    %430 = vmatmul.mubr.bf16.gmra.mxu0 %v122
    %v431 = vpop.f32.mrf.mxu0
    %v432 = vadd.f32 0.0, %v431
    %v433 = vpop.f32.mrf.mxu0
    %v434 = vpop.f32.mrf.mxu0
    %v435 = vadd.f32 0.0, %v434
    %v436 = vpop.f32.mrf.mxu0
    %437 = vmatprep.mubr.bf16.mxu0 %v125
    %438 = vmatmul.mubr.bf16.gmra.mxu0 %v124
    %v439 = vpop.f32.mrf.mxu0
    %v440 = vadd.f32 0.0, %v439
    %v441 = vpop.f32.mrf.mxu0
    %v442 = vpop.f32.mrf.mxu0
    %v443 = vadd.f32 0.0, %v442
    %v444 = vpop.f32.mrf.mxu0
    %445 = vmatprep.mubr.bf16.mxu0 %v127
    %446 = vmatmul.mubr.bf16.gmra.mxu0 %v126
    %v447 = vpop.f32.mrf.mxu0
    %v448 = vadd.f32 0.0, %v447
    %v449 = vpop.f32.mrf.mxu0
    %v450 = vpop.f32.mrf.mxu0
    %v451 = vadd.f32 0.0, %v450
    %v452 = vpop.f32.mrf.mxu0
    %453 = vmatprep.mubr.bf16.mxu0 %v129
    %454 = vmatmul.mubr.bf16.gmra.mxu0 %v128
    %v455 = vpop.f32.mrf.mxu0
    %v456 = vadd.f32 0.0, %v455
    %v457 = vpop.f32.mrf.mxu0
    %v458 = vpop.f32.mrf.mxu0
    %v459 = vadd.f32 0.0, %v458
    %v460 = vpop.f32.mrf.mxu0
    %461 = vmatprep.mubr.bf16.mxu0 %v131
    %462 = vmatmul.mubr.bf16.gmra.mxu0 %v130
    %v463 = vpop.f32.mrf.mxu0
    %v464 = vadd.f32 0.0, %v463
    %v465 = vpop.f32.mrf.mxu0
    %v466 = vpop.f32.mrf.mxu0
    %v467 = vadd.f32 0.0, %v466
    %v468 = vpop.f32.mrf.mxu0
    %469 = vmatprep.mubr.bf16.mxu0 %v133
    %470 = vmatmul.mubr.bf16.gmra.mxu0 %v132
    %v471 = vpop.f32.mrf.mxu0
    %v472 = vadd.f32 0.0, %v471
    %v473 = vpop.f32.mrf.mxu0
    %v474 = vpop.f32.mrf.mxu0
    %v475 = vadd.f32 0.0, %v474
    %v476 = vpop.f32.mrf.mxu0
    %477 = vmatprep.mubr.bf16.mxu0 %v135
    %478 = vmatmul.mubr.bf16.gmra.mxu0 %v134
    %v479 = vpop.f32.mrf.mxu0
    %v480 = vadd.f32 0.0, %v479
    %v481 = vpop.f32.mrf.mxu0
    %v482 = vpop.f32.mrf.mxu0
    %v483 = vadd.f32 0.0, %v482
    %v484 = vpop.f32.mrf.mxu0
    %485 = vmatprep.mubr.bf16.mxu0 %v137
    %486 = vmatmul.mubr.bf16.gmra.mxu0 %v136
    %v487 = vpop.f32.mrf.mxu0
    %v488 = vadd.f32 0.0, %v487
    %v489 = vpop.f32.mrf.mxu0
    %v490 = vpop.f32.mrf.mxu0
    %v491 = vadd.f32 0.0, %v490
    %v492 = vpop.f32.mrf.mxu0
    %493 = vmatprep.mubr.bf16.mxu0 %v139
    %494 = vmatmul.mubr.bf16.gmra.mxu0 %v138
    %v495 = vpop.f32.mrf.mxu0
    %v496 = vadd.f32 0.0, %v495
    %v497 = vpop.f32.mrf.mxu0
    %v498 = vpop.f32.mrf.mxu0
    %v499 = vadd.f32 0.0, %v498
    %v500 = vpop.f32.mrf.mxu0
    %501 = vmatprep.mubr.bf16.mxu0 %v141
    %502 = vmatmul.mubr.bf16.gmra.mxu0 %v140
    %v503 = vpop.f32.mrf.mxu0
    %v504 = vadd.f32 0.0, %v503
    %v505 = vpop.f32.mrf.mxu0
    %v506 = vpop.f32.mrf.mxu0
    %v507 = vadd.f32 0.0, %v506
    %v508 = vpop.f32.mrf.mxu0
    %509 = vmatprep.mubr.bf16.mxu0 %v143
    %510 = vmatmul.mubr.bf16.gmra.mxu0 %v142
    %v511 = vpop.f32.mrf.mxu0
    %v512 = vadd.f32 0.0, %v511
    %v513 = vpop.f32.mrf.mxu0
    %v514 = vpop.f32.mrf.mxu0
    %v515 = vadd.f32 0.0, %v514
    %v516 = vpop.f32.mrf.mxu0
    %517 = vmatprep.mubr.bf16.mxu0 %v145
    %518 = vmatmul.mubr.bf16.gmra.mxu0 %v144
    %v519 = vpop.f32.mrf.mxu0
    %v520 = vadd.f32 0.0, %v519
    %v521 = vpop.f32.mrf.mxu0
    %v522 = vpop.f32.mrf.mxu0
    %v523 = vadd.f32 0.0, %v522
    %v524 = vpop.f32.mrf.mxu0
    %525 = vmatprep.mubr.bf16.mxu0 %v147
    %526 = vmatmul.mubr.bf16.gmra.mxu0 %v146
    %v527 = vpop.f32.mrf.mxu0
    %v528 = vadd.f32 0.0, %v527
    %v529 = vpop.f32.mrf.mxu0
    %v530 = vpop.f32.mrf.mxu0
    %v531 = vadd.f32 0.0, %v530
    %v532 = vpop.f32.mrf.mxu0
    %533 = vdwg.mxu0
    %v534 = vld [vmem:[%s3] sm:$0x1f]
    %v535 = vpack.c.bf16 %v411, %v408
    %v536 = vpack.c.bf16 %v419, %v416
    %v537 = vpack.c.bf16 %v427, %v424
    %v538 = vpack.c.bf16 %v435, %v432
    %v539 = vpack.c.bf16 %v443, %v440
    %v540 = vpack.c.bf16 %v451, %v448
    %v541 = vpack.c.bf16 %v459, %v456
    %v542 = vpack.c.bf16 %v467, %v464
    %v543 = vpack.c.bf16 %v475, %v472
    %v544 = vpack.c.bf16 %v483, %v480
    %v545 = vpack.c.bf16 %v491, %v488
    %v546 = vpack.c.bf16 %v499, %v496
    %v547 = vpack.c.bf16 %v507, %v504
    %v548 = vpack.c.bf16 %v515, %v512
    %v549 = vpack.c.bf16 %v523, %v520
    %v550 = vpack.c.bf16 %v531, %v528
    %v551 = vld [vmem:[%s2] sm:$0xff]
    %v552 = vld [vmem:[%s2 + $0x8] sm:$0xff]
    %v553 = vld [vmem:[%s2 + $0x10] sm:$0xff]
    %v554 = vld [vmem:[%s2 + $0x18] sm:$0xff]
    %v555 = vpack.c.bf16 %v552, %v551
    %v556 = vpack.c.bf16 %v554, %v553
    %v557 = vlaneseq
    %v558 = vshrl.u32 %v557, 7
    %v559 = vsub.s32 0, %v558
    %v560 = vrot.slane %v534, %v559
    %vm561 = vcmask 261120
    %v563 = vsel %vm561, %v535, 0
    %v566 = vsel %vm561, %v536, 0
    %v569 = vsel %vm561, %v537, 0
    %v572 = vsel %vm561, %v538, 0
    %v575 = vsel %vm561, %v539, 0
    %v578 = vsel %vm561, %v540, 0
    %v581 = vsel %vm561, %v541, 0
    %v584 = vsel %vm561, %v542, 0
    %v587 = vsel %vm561, %v543, 0
    %v590 = vsel %vm561, %v544, 0
    %v593 = vsel %vm561, %v545, 0
    %v596 = vsel %vm561, %v546, 0
    %v599 = vsel %vm561, %v547, 0
    %v602 = vsel %vm561, %v548, 0
    %v605 = vsel %vm561, %v549, 0
    %v608 = vsel %vm561, %v550, 0
    %610 = vmatprep.subr.bf16.mxu0 0
    %611 = vmatpush1.bf16.msra.mxu0 0
    %612 = vmatprep.subr.bf16.mxu0 0
    %613 = vmatpush1.bf16.msra.mxu0 0
    %614 = vmatprep.subr.bf16.mxu0 0
    %615 = vmatpush1.bf16.msra.mxu0 0
    %616 = vmatprep.subr.bf16.mxu0 0
    %617 = vmatpush1.bf16.msra.mxu0 0
    %618 = vmatprep.subr.bf16.mxu0 0
    %619 = vmatpush1.bf16.msra.mxu0 0
    %620 = vmatprep.subr.bf16.mxu0 0
    %621 = vmatpush1.bf16.msra.mxu0 0
    %622 = vmatprep.subr.bf16.mxu0 0
    %623 = vmatpush1.bf16.msra.mxu0 %v556
    %624 = vmatprep.subr.bf16.mxu0 0
    %625 = vmatpush1.bf16.msra.mxu0 %v555
    %626 = vmatprep.subr.bf16.mxu0 0
    %627 = vmatpush2.bf16.msra.mxu0 0
    %628 = vmatprep.subr.bf16.mxu0 0
    %629 = vmatpush2.bf16.msra.mxu0 0
    %630 = vmatprep.subr.bf16.mxu0 0
    %631 = vmatpush2.bf16.msra.mxu0 0
    %632 = vmatprep.subr.bf16.mxu0 0
    %633 = vmatpush2.bf16.msra.mxu0 0
    %634 = vmatprep.subr.bf16.mxu0 0
    %635 = vmatpush2.bf16.msra.mxu0 0
    %636 = vmatprep.subr.bf16.mxu0 0
    %637 = vmatpush2.bf16.msra.mxu0 0
    %638 = vmatprep.subr.bf16.mxu0 0
    %639 = vmatpush2.bf16.msra.mxu0 0
    %640 = vmatprep.subr.bf16.mxu0 0
    %641 = vmatpush2.bf16.msra.mxu0 0
    %642 = vmatprep.mubr.bf16.mxu0 0
    %643 = vmatmul.mubr.bf16.gmra.mxu0 %v563
    %v644 = vpop.f32.mrf.mxu0
    %v645 = vadd.f32 %v560, %v644
    %v646 = vpop.f32.mrf.mxu0
    %v647 = vpop.f32.mrf.mxu0
    %v648 = vadd.f32 %v560, %v647
    %v649 = vpop.f32.mrf.mxu0
    %650 = vmatprep.mubr.bf16.mxu0 0
    %651 = vmatmul.mubr.bf16.gmra.mxu0 %v566
    %v652 = vpop.f32.mrf.mxu0
    %v653 = vadd.f32 %v560, %v652
    %v654 = vpop.f32.mrf.mxu0
    %v655 = vpop.f32.mrf.mxu0
    %v656 = vadd.f32 %v560, %v655
    %v657 = vpop.f32.mrf.mxu0
    %658 = vmatprep.mubr.bf16.mxu0 0
    %659 = vmatmul.mubr.bf16.gmra.mxu0 %v569
    %v660 = vpop.f32.mrf.mxu0
    %v661 = vadd.f32 %v560, %v660
    %v662 = vpop.f32.mrf.mxu0
    %v663 = vpop.f32.mrf.mxu0
    %v664 = vadd.f32 %v560, %v663
    %v665 = vpop.f32.mrf.mxu0
    %666 = vmatprep.mubr.bf16.mxu0 0
    %667 = vmatmul.mubr.bf16.gmra.mxu0 %v572
    %v668 = vpop.f32.mrf.mxu0
    %v669 = vadd.f32 %v560, %v668
    %v670 = vpop.f32.mrf.mxu0
    %v671 = vpop.f32.mrf.mxu0
    %v672 = vadd.f32 %v560, %v671
    %v673 = vpop.f32.mrf.mxu0
    %674 = vmatprep.mubr.bf16.mxu0 0
    %675 = vmatmul.mubr.bf16.gmra.mxu0 %v575
    %v676 = vpop.f32.mrf.mxu0
    %v677 = vadd.f32 %v560, %v676
    %v678 = vpop.f32.mrf.mxu0
    %v679 = vpop.f32.mrf.mxu0
    %v680 = vadd.f32 %v560, %v679
    %v681 = vpop.f32.mrf.mxu0
    %682 = vmatprep.mubr.bf16.mxu0 0
    %683 = vmatmul.mubr.bf16.gmra.mxu0 %v578
    %v684 = vpop.f32.mrf.mxu0
    %v685 = vadd.f32 %v560, %v684
    %v686 = vpop.f32.mrf.mxu0
    %v687 = vpop.f32.mrf.mxu0
    %v688 = vadd.f32 %v560, %v687
    %v689 = vpop.f32.mrf.mxu0
    %690 = vmatprep.mubr.bf16.mxu0 0
    %691 = vmatmul.mubr.bf16.gmra.mxu0 %v581
    %v692 = vpop.f32.mrf.mxu0
    %v693 = vadd.f32 %v560, %v692
    %v694 = vpop.f32.mrf.mxu0
    %v695 = vpop.f32.mrf.mxu0
    %v696 = vadd.f32 %v560, %v695
    %v697 = vpop.f32.mrf.mxu0
    %698 = vmatprep.mubr.bf16.mxu0 0
    %699 = vmatmul.mubr.bf16.gmra.mxu0 %v584
    %v700 = vpop.f32.mrf.mxu0
    %v701 = vadd.f32 %v560, %v700
    %v702 = vpop.f32.mrf.mxu0
    %v703 = vpop.f32.mrf.mxu0
    %v704 = vadd.f32 %v560, %v703
    %v705 = vpop.f32.mrf.mxu0
    %706 = vmatprep.mubr.bf16.mxu0 0
    %707 = vmatmul.mubr.bf16.gmra.mxu0 %v587
    %v708 = vpop.f32.mrf.mxu0
    %v709 = vadd.f32 %v560, %v708
    %v710 = vpop.f32.mrf.mxu0
    %v711 = vpop.f32.mrf.mxu0
    %v712 = vadd.f32 %v560, %v711
    %v713 = vpop.f32.mrf.mxu0
    %714 = vmatprep.mubr.bf16.mxu0 0
    %715 = vmatmul.mubr.bf16.gmra.mxu0 %v590
    %v716 = vpop.f32.mrf.mxu0
    %v717 = vadd.f32 %v560, %v716
    %v718 = vpop.f32.mrf.mxu0
    %v719 = vpop.f32.mrf.mxu0
    %v720 = vadd.f32 %v560, %v719
    %v721 = vpop.f32.mrf.mxu0
    %722 = vmatprep.mubr.bf16.mxu0 0
    %723 = vmatmul.mubr.bf16.gmra.mxu0 %v593
    %v724 = vpop.f32.mrf.mxu0
    %v725 = vadd.f32 %v560, %v724
    %v726 = vpop.f32.mrf.mxu0
    %v727 = vpop.f32.mrf.mxu0
    %v728 = vadd.f32 %v560, %v727
    %v729 = vpop.f32.mrf.mxu0
    %730 = vmatprep.mubr.bf16.mxu0 0
    %731 = vmatmul.mubr.bf16.gmra.mxu0 %v596
    %v732 = vpop.f32.mrf.mxu0
    %v733 = vadd.f32 %v560, %v732
    %v734 = vpop.f32.mrf.mxu0
    %v735 = vpop.f32.mrf.mxu0
    %v736 = vadd.f32 %v560, %v735
    %v737 = vpop.f32.mrf.mxu0
    %738 = vmatprep.mubr.bf16.mxu0 0
    %739 = vmatmul.mubr.bf16.gmra.mxu0 %v599
    %v740 = vpop.f32.mrf.mxu0
    %v741 = vadd.f32 %v560, %v740
    %v742 = vpop.f32.mrf.mxu0
    %v743 = vpop.f32.mrf.mxu0
    %v744 = vadd.f32 %v560, %v743
    %v745 = vpop.f32.mrf.mxu0
    %746 = vmatprep.mubr.bf16.mxu0 0
    %747 = vmatmul.mubr.bf16.gmra.mxu0 %v602
    %v748 = vpop.f32.mrf.mxu0
    %v749 = vadd.f32 %v560, %v748
    %v750 = vpop.f32.mrf.mxu0
    %v751 = vpop.f32.mrf.mxu0
    %v752 = vadd.f32 %v560, %v751
    %v753 = vpop.f32.mrf.mxu0
    %754 = vmatprep.mubr.bf16.mxu0 0
    %755 = vmatmul.mubr.bf16.gmra.mxu0 %v605
    %v756 = vpop.f32.mrf.mxu0
    %v757 = vadd.f32 %v560, %v756
    %v758 = vpop.f32.mrf.mxu0
    %v759 = vpop.f32.mrf.mxu0
    %v760 = vadd.f32 %v560, %v759
    %v761 = vpop.f32.mrf.mxu0
    %762 = vmatprep.mubr.bf16.mxu0 0
    %763 = vmatmul.mubr.bf16.gmra.mxu0 %v608
    %v764 = vpop.f32.mrf.mxu0
    %v765 = vadd.f32 %v560, %v764
    %v766 = vpop.f32.mrf.mxu0
    %v767 = vpop.f32.mrf.mxu0
    %v768 = vadd.f32 %v560, %v767
    %v769 = vpop.f32.mrf.mxu0
    %770 = vdwg.mxu0
    %v771 = vsel %vm561, %v645, 0.0
    %772 = vadd.xlane.f32.xlu0 %v771
    %v773 = vpop.xlane.xlu0 %772
    %v774 = vsel %vm561, %v648, 0.0
    %775 = vadd.xlane.f32.xlu0 %v774
    %v776 = vpop.xlane.xlu0 %775
    %v777 = vsel %vm561, %v653, 0.0
    %778 = vadd.xlane.f32.xlu0 %v777
    %v779 = vpop.xlane.xlu0 %778
    %v780 = vsel %vm561, %v656, 0.0
    %781 = vadd.xlane.f32.xlu0 %v780
    %v782 = vpop.xlane.xlu0 %781
    %v783 = vsel %vm561, %v661, 0.0
    %784 = vadd.xlane.f32.xlu0 %v783
    %v785 = vpop.xlane.xlu0 %784
    %v786 = vsel %vm561, %v664, 0.0
    %787 = vadd.xlane.f32.xlu0 %v786
    %v788 = vpop.xlane.xlu0 %787
    %v789 = vsel %vm561, %v669, 0.0
    %790 = vadd.xlane.f32.xlu0 %v789
    %v791 = vpop.xlane.xlu0 %790
    %v792 = vsel %vm561, %v672, 0.0
    %793 = vadd.xlane.f32.xlu0 %v792
    %v794 = vpop.xlane.xlu0 %793
    %v795 = vsel %vm561, %v677, 0.0
    %796 = vadd.xlane.f32.xlu0 %v795
    %v797 = vpop.xlane.xlu0 %796
    %v798 = vsel %vm561, %v680, 0.0
    %799 = vadd.xlane.f32.xlu0 %v798
    %v800 = vpop.xlane.xlu0 %799
    %v801 = vsel %vm561, %v685, 0.0
    %802 = vadd.xlane.f32.xlu0 %v801
    %v803 = vpop.xlane.xlu0 %802
    %v804 = vsel %vm561, %v688, 0.0
    %805 = vadd.xlane.f32.xlu0 %v804
    %v806 = vpop.xlane.xlu0 %805
    %v807 = vsel %vm561, %v693, 0.0
    %808 = vadd.xlane.f32.xlu0 %v807
    %v809 = vpop.xlane.xlu0 %808
    %v810 = vsel %vm561, %v696, 0.0
    %811 = vadd.xlane.f32.xlu0 %v810
    %v812 = vpop.xlane.xlu0 %811
    %v813 = vsel %vm561, %v701, 0.0
    %814 = vadd.xlane.f32.xlu0 %v813
    %v815 = vpop.xlane.xlu0 %814
    %v816 = vsel %vm561, %v704, 0.0
    %817 = vadd.xlane.f32.xlu0 %v816
    %v818 = vpop.xlane.xlu0 %817
    %v819 = vsel %vm561, %v709, 0.0
    %820 = vadd.xlane.f32.xlu0 %v819
    %v821 = vpop.xlane.xlu0 %820
    %v822 = vsel %vm561, %v712, 0.0
    %823 = vadd.xlane.f32.xlu0 %v822
    %v824 = vpop.xlane.xlu0 %823
    %v825 = vsel %vm561, %v717, 0.0
    %826 = vadd.xlane.f32.xlu0 %v825
    %v827 = vpop.xlane.xlu0 %826
    %v828 = vsel %vm561, %v720, 0.0
    %829 = vadd.xlane.f32.xlu0 %v828
    %v830 = vpop.xlane.xlu0 %829
    %v831 = vsel %vm561, %v725, 0.0
    %832 = vadd.xlane.f32.xlu0 %v831
    %v833 = vpop.xlane.xlu0 %832
    %v834 = vsel %vm561, %v728, 0.0
    %835 = vadd.xlane.f32.xlu0 %v834
    %v836 = vpop.xlane.xlu0 %835
    %v837 = vsel %vm561, %v733, 0.0
    %838 = vadd.xlane.f32.xlu0 %v837
    %v839 = vpop.xlane.xlu0 %838
    %v840 = vsel %vm561, %v736, 0.0
    %841 = vadd.xlane.f32.xlu0 %v840
    %v842 = vpop.xlane.xlu0 %841
    %v843 = vsel %vm561, %v741, 0.0
    %844 = vadd.xlane.f32.xlu0 %v843
    %v845 = vpop.xlane.xlu0 %844
    %v846 = vsel %vm561, %v744, 0.0
    %847 = vadd.xlane.f32.xlu0 %v846
    %v848 = vpop.xlane.xlu0 %847
    %v849 = vsel %vm561, %v749, 0.0
    %850 = vadd.xlane.f32.xlu0 %v849
    %v851 = vpop.xlane.xlu0 %850
    %v852 = vsel %vm561, %v752, 0.0
    %853 = vadd.xlane.f32.xlu0 %v852
    %v854 = vpop.xlane.xlu0 %853
    %v855 = vsel %vm561, %v757, 0.0
    %856 = vadd.xlane.f32.xlu0 %v855
    %v857 = vpop.xlane.xlu0 %856
    %v858 = vsel %vm561, %v760, 0.0
    %859 = vadd.xlane.f32.xlu0 %v858
    %v860 = vpop.xlane.xlu0 %859
    %v861 = vsel %vm561, %v765, 0.0
    %862 = vadd.xlane.f32.xlu0 %v861
    %v863 = vpop.xlane.xlu0 %862
    %v864 = vsel %vm561, %v768, 0.0
    %865 = vadd.xlane.f32.xlu0 %v864
    %v866 = vpop.xlane.xlu0 %865
    %v867 = vrcp.pop 32.0
    %v868 = vmul.f32 %v773, %v867
    %v869 = vmul.f32 %v776, %v867
    %v870 = vmul.f32 %v779, %v867
    %v871 = vmul.f32 %v782, %v867
    %v872 = vmul.f32 %v785, %v867
    %v873 = vmul.f32 %v788, %v867
    %v874 = vmul.f32 %v791, %v867
    %v875 = vmul.f32 %v794, %v867
    %v876 = vmul.f32 %v797, %v867
    %v877 = vmul.f32 %v800, %v867
    %v878 = vmul.f32 %v803, %v867
    %v879 = vmul.f32 %v806, %v867
    %v880 = vmul.f32 %v809, %v867
    %v881 = vmul.f32 %v812, %v867
    %v882 = vmul.f32 %v815, %v867
    %v883 = vmul.f32 %v818, %v867
    %v884 = vmul.f32 %v821, %v867
    %v885 = vmul.f32 %v824, %v867
    %v886 = vmul.f32 %v827, %v867
    %v887 = vmul.f32 %v830, %v867
    %v888 = vmul.f32 %v833, %v867
    %v889 = vmul.f32 %v836, %v867
    %v890 = vmul.f32 %v839, %v867
    %v891 = vmul.f32 %v842, %v867
    %v892 = vmul.f32 %v845, %v867
    %v893 = vmul.f32 %v848, %v867
    %v894 = vmul.f32 %v851, %v867
    %v895 = vmul.f32 %v854, %v867
    %v896 = vmul.f32 %v857, %v867
    %v897 = vmul.f32 %v860, %v867
    %v898 = vmul.f32 %v863, %v867
    %v899 = vmul.f32 %v866, %v867
    %v900 = vmul.f32 %v645, %v645
    %v901 = vmul.f32 %v648, %v648
    %v902 = vmul.f32 %v653, %v653
    %v903 = vmul.f32 %v656, %v656
    %v904 = vmul.f32 %v661, %v661
    %v905 = vmul.f32 %v664, %v664
    %v906 = vmul.f32 %v669, %v669
    %v907 = vmul.f32 %v672, %v672
    %v908 = vmul.f32 %v677, %v677
    %v909 = vmul.f32 %v680, %v680
    %v910 = vmul.f32 %v685, %v685
    %v911 = vmul.f32 %v688, %v688
    %v912 = vmul.f32 %v693, %v693
    %v913 = vmul.f32 %v696, %v696
    %v914 = vmul.f32 %v701, %v701
    %v915 = vmul.f32 %v704, %v704
    %v916 = vmul.f32 %v709, %v709
    %v917 = vmul.f32 %v712, %v712
    %v918 = vmul.f32 %v717, %v717
    %v919 = vmul.f32 %v720, %v720
    %v920 = vmul.f32 %v725, %v725
    %v921 = vmul.f32 %v728, %v728
    %v922 = vmul.f32 %v733, %v733
    %v923 = vmul.f32 %v736, %v736
    %v924 = vmul.f32 %v741, %v741
    %v925 = vmul.f32 %v744, %v744
    %v926 = vmul.f32 %v749, %v749
    %v927 = vmul.f32 %v752, %v752
    %v928 = vmul.f32 %v757, %v757
    %v929 = vmul.f32 %v760, %v760
    %v930 = vmul.f32 %v765, %v765
    %v931 = vmul.f32 %v768, %v768
    %v932 = vsel %vm561, %v900, 0.0
    %933 = vadd.xlane.f32.xlu0 %v932
    %v934 = vpop.xlane.xlu0 %933
    %v935 = vsel %vm561, %v901, 0.0
    %936 = vadd.xlane.f32.xlu0 %v935
    %v937 = vpop.xlane.xlu0 %936
    %v938 = vsel %vm561, %v902, 0.0
    %939 = vadd.xlane.f32.xlu0 %v938
    %v940 = vpop.xlane.xlu0 %939
    %v941 = vsel %vm561, %v903, 0.0
    %942 = vadd.xlane.f32.xlu0 %v941
    %v943 = vpop.xlane.xlu0 %942
    %v944 = vsel %vm561, %v904, 0.0
    %945 = vadd.xlane.f32.xlu0 %v944
    %v946 = vpop.xlane.xlu0 %945
    %v947 = vsel %vm561, %v905, 0.0
    %948 = vadd.xlane.f32.xlu0 %v947
    %v949 = vpop.xlane.xlu0 %948
    %v950 = vsel %vm561, %v906, 0.0
    %951 = vadd.xlane.f32.xlu0 %v950
    %v952 = vpop.xlane.xlu0 %951
    %v953 = vsel %vm561, %v907, 0.0
    %954 = vadd.xlane.f32.xlu0 %v953
    %v955 = vpop.xlane.xlu0 %954
    %v956 = vsel %vm561, %v908, 0.0
    %957 = vadd.xlane.f32.xlu0 %v956
    %v958 = vpop.xlane.xlu0 %957
    %v959 = vsel %vm561, %v909, 0.0
    %960 = vadd.xlane.f32.xlu0 %v959
    %v961 = vpop.xlane.xlu0 %960
    %v962 = vsel %vm561, %v910, 0.0
    %963 = vadd.xlane.f32.xlu0 %v962
    %v964 = vpop.xlane.xlu0 %963
    %v965 = vsel %vm561, %v911, 0.0
    %966 = vadd.xlane.f32.xlu0 %v965
    %v967 = vpop.xlane.xlu0 %966
    %v968 = vsel %vm561, %v912, 0.0
    %969 = vadd.xlane.f32.xlu0 %v968
    %v970 = vpop.xlane.xlu0 %969
    %v971 = vsel %vm561, %v913, 0.0
    %972 = vadd.xlane.f32.xlu0 %v971
    %v973 = vpop.xlane.xlu0 %972
    %v974 = vsel %vm561, %v914, 0.0
    %975 = vadd.xlane.f32.xlu0 %v974
    %v976 = vpop.xlane.xlu0 %975
    %v977 = vsel %vm561, %v915, 0.0
    %978 = vadd.xlane.f32.xlu0 %v977
    %v979 = vpop.xlane.xlu0 %978
    %v980 = vsel %vm561, %v916, 0.0
    %981 = vadd.xlane.f32.xlu0 %v980
    %v982 = vpop.xlane.xlu0 %981
    %v983 = vsel %vm561, %v917, 0.0
    %984 = vadd.xlane.f32.xlu0 %v983
    %v985 = vpop.xlane.xlu0 %984
    %v986 = vsel %vm561, %v918, 0.0
    %987 = vadd.xlane.f32.xlu0 %v986
    %v988 = vpop.xlane.xlu0 %987
    %v989 = vsel %vm561, %v919, 0.0
    %990 = vadd.xlane.f32.xlu0 %v989
    %v991 = vpop.xlane.xlu0 %990
    %v992 = vsel %vm561, %v920, 0.0
    %993 = vadd.xlane.f32.xlu0 %v992
    %v994 = vpop.xlane.xlu0 %993
    %v995 = vsel %vm561, %v921, 0.0
    %996 = vadd.xlane.f32.xlu0 %v995
    %v997 = vpop.xlane.xlu0 %996
    %v998 = vsel %vm561, %v922, 0.0
    %999 = vadd.xlane.f32.xlu0 %v998
    %v1000 = vpop.xlane.xlu0 %999
    %v1001 = vsel %vm561, %v923, 0.0
    %1002 = vadd.xlane.f32.xlu0 %v1001
    %v1003 = vpop.xlane.xlu0 %1002
    %v1004 = vsel %vm561, %v924, 0.0
    %1005 = vadd.xlane.f32.xlu0 %v1004
    %v1006 = vpop.xlane.xlu0 %1005
    %v1007 = vsel %vm561, %v925, 0.0
    %1008 = vadd.xlane.f32.xlu0 %v1007
    %v1009 = vpop.xlane.xlu0 %1008
    %v1010 = vsel %vm561, %v926, 0.0
    %1011 = vadd.xlane.f32.xlu0 %v1010
    %v1012 = vpop.xlane.xlu0 %1011
    %v1013 = vsel %vm561, %v927, 0.0
    %1014 = vadd.xlane.f32.xlu0 %v1013
    %v1015 = vpop.xlane.xlu0 %1014
    %v1016 = vsel %vm561, %v928, 0.0
    %1017 = vadd.xlane.f32.xlu0 %v1016
    %v1018 = vpop.xlane.xlu0 %1017
    %v1019 = vsel %vm561, %v929, 0.0
    %1020 = vadd.xlane.f32.xlu0 %v1019
    %v1021 = vpop.xlane.xlu0 %1020
    %v1022 = vsel %vm561, %v930, 0.0
    %1023 = vadd.xlane.f32.xlu0 %v1022
    %v1024 = vpop.xlane.xlu0 %1023
    %v1025 = vsel %vm561, %v931, 0.0
    %1026 = vadd.xlane.f32.xlu0 %v1025
    %v1027 = vpop.xlane.xlu0 %1026
    %v1028 = vmul.f32 %v934, %v867
    %v1029 = vmul.f32 %v937, %v867
    %v1030 = vmul.f32 %v940, %v867
    %v1031 = vmul.f32 %v943, %v867
    %v1032 = vmul.f32 %v946, %v867
    %v1033 = vmul.f32 %v949, %v867
    %v1034 = vmul.f32 %v952, %v867
    %v1035 = vmul.f32 %v955, %v867
    %v1036 = vmul.f32 %v958, %v867
    %v1037 = vmul.f32 %v961, %v867
    %v1038 = vmul.f32 %v964, %v867
    %v1039 = vmul.f32 %v967, %v867
    %v1040 = vmul.f32 %v970, %v867
    %v1041 = vmul.f32 %v973, %v867
    %v1042 = vmul.f32 %v976, %v867
    %v1043 = vmul.f32 %v979, %v867
    %v1044 = vmul.f32 %v982, %v867
    %v1045 = vmul.f32 %v985, %v867
    %v1046 = vmul.f32 %v988, %v867
    %v1047 = vmul.f32 %v991, %v867
    %v1048 = vmul.f32 %v994, %v867
    %v1049 = vmul.f32 %v997, %v867
    %v1050 = vmul.f32 %v1000, %v867
    %v1051 = vmul.f32 %v1003, %v867
    %v1052 = vmul.f32 %v1006, %v867
    %v1053 = vmul.f32 %v1009, %v867
    %v1054 = vmul.f32 %v1012, %v867
    %v1055 = vmul.f32 %v1015, %v867
    %v1056 = vmul.f32 %v1018, %v867
    %v1057 = vmul.f32 %v1021, %v867
    %v1058 = vmul.f32 %v1024, %v867
    %v1059 = vmul.f32 %v1027, %v867
    %v1060 = vmul.f32 %v868, %v868
    %v1061 = vmul.f32 %v869, %v869
    %v1062 = vmul.f32 %v870, %v870
    %v1063 = vmul.f32 %v871, %v871
    %v1064 = vmul.f32 %v872, %v872
    %v1065 = vmul.f32 %v873, %v873
    %v1066 = vmul.f32 %v874, %v874
    %v1067 = vmul.f32 %v875, %v875
    %v1068 = vmul.f32 %v876, %v876
    %v1069 = vmul.f32 %v877, %v877
    %v1070 = vmul.f32 %v878, %v878
    %v1071 = vmul.f32 %v879, %v879
    %v1072 = vmul.f32 %v880, %v880
    %v1073 = vmul.f32 %v881, %v881
    %v1074 = vmul.f32 %v882, %v882
    %v1075 = vmul.f32 %v883, %v883
    %v1076 = vmul.f32 %v884, %v884
    %v1077 = vmul.f32 %v885, %v885
    %v1078 = vmul.f32 %v886, %v886
    %v1079 = vmul.f32 %v887, %v887
    %v1080 = vmul.f32 %v888, %v888
    %v1081 = vmul.f32 %v889, %v889
    %v1082 = vmul.f32 %v890, %v890
    %v1083 = vmul.f32 %v891, %v891
    %v1084 = vmul.f32 %v892, %v892
    %v1085 = vmul.f32 %v893, %v893
    %v1086 = vmul.f32 %v894, %v894
    %v1087 = vmul.f32 %v895, %v895
    %v1088 = vmul.f32 %v896, %v896
    %v1089 = vmul.f32 %v897, %v897
    %v1090 = vmul.f32 %v898, %v898
    %v1091 = vmul.f32 %v899, %v899
    %v1092 = vsub.f32 %v1028, %v1060
    %v1093 = vsub.f32 %v1029, %v1061
    %v1094 = vsub.f32 %v1030, %v1062
    %v1095 = vsub.f32 %v1031, %v1063
    %v1096 = vsub.f32 %v1032, %v1064
    %v1097 = vsub.f32 %v1033, %v1065
    %v1098 = vsub.f32 %v1034, %v1066
    %v1099 = vsub.f32 %v1035, %v1067
    %v1100 = vsub.f32 %v1036, %v1068
    %v1101 = vsub.f32 %v1037, %v1069
    %v1102 = vsub.f32 %v1038, %v1070
    %v1103 = vsub.f32 %v1039, %v1071
    %v1104 = vsub.f32 %v1040, %v1072
    %v1105 = vsub.f32 %v1041, %v1073
    %v1106 = vsub.f32 %v1042, %v1074
    %v1107 = vsub.f32 %v1043, %v1075
    %v1108 = vsub.f32 %v1044, %v1076
    %v1109 = vsub.f32 %v1045, %v1077
    %v1110 = vsub.f32 %v1046, %v1078
    %v1111 = vsub.f32 %v1047, %v1079
    %v1112 = vsub.f32 %v1048, %v1080
    %v1113 = vsub.f32 %v1049, %v1081
    %v1114 = vsub.f32 %v1050, %v1082
    %v1115 = vsub.f32 %v1051, %v1083
    %v1116 = vsub.f32 %v1052, %v1084
    %v1117 = vsub.f32 %v1053, %v1085
    %v1118 = vsub.f32 %v1054, %v1086
    %v1119 = vsub.f32 %v1055, %v1087
    %v1120 = vsub.f32 %v1056, %v1088
    %v1121 = vsub.f32 %v1057, %v1089
    %v1122 = vsub.f32 %v1058, %v1090
    %v1123 = vsub.f32 %v1059, %v1091
    %v1124 = vsub.f32 %v645, %v868
    %v1125 = vsub.f32 %v648, %v869
    %v1126 = vsub.f32 %v653, %v870
    %v1127 = vsub.f32 %v656, %v871
    %v1128 = vsub.f32 %v661, %v872
    %v1129 = vsub.f32 %v664, %v873
    %v1130 = vsub.f32 %v669, %v874
    %v1131 = vsub.f32 %v672, %v875
    %v1132 = vsub.f32 %v677, %v876
    %v1133 = vsub.f32 %v680, %v877
    %v1134 = vsub.f32 %v685, %v878
    %v1135 = vsub.f32 %v688, %v879
    %v1136 = vsub.f32 %v693, %v880
    %v1137 = vsub.f32 %v696, %v881
    %v1138 = vsub.f32 %v701, %v882
    %v1139 = vsub.f32 %v704, %v883
    %v1140 = vsub.f32 %v709, %v884
    %v1141 = vsub.f32 %v712, %v885
    %v1142 = vsub.f32 %v717, %v886
    %v1143 = vsub.f32 %v720, %v887
    %v1144 = vsub.f32 %v725, %v888
    %v1145 = vsub.f32 %v728, %v889
    %v1146 = vsub.f32 %v733, %v890
    %v1147 = vsub.f32 %v736, %v891
    %v1148 = vsub.f32 %v741, %v892
    %v1149 = vsub.f32 %v744, %v893
    %v1150 = vsub.f32 %v749, %v894
    %v1151 = vsub.f32 %v752, %v895
    %v1152 = vsub.f32 %v757, %v896
    %v1153 = vsub.f32 %v760, %v897
    %v1154 = vsub.f32 %v765, %v898
    %v1155 = vsub.f32 %v768, %v899
    %v1156 = vadd.f32 %v1092, 1e-05
    %v1157 = vadd.f32 %v1093, 1e-05
    %v1158 = vadd.f32 %v1094, 1e-05
    %v1159 = vadd.f32 %v1095, 1e-05
    %v1160 = vadd.f32 %v1096, 1e-05
    %v1161 = vadd.f32 %v1097, 1e-05
    %v1162 = vadd.f32 %v1098, 1e-05
    %v1163 = vadd.f32 %v1099, 1e-05
    %v1164 = vadd.f32 %v1100, 1e-05
    %v1165 = vadd.f32 %v1101, 1e-05
    %v1166 = vadd.f32 %v1102, 1e-05
    %v1167 = vadd.f32 %v1103, 1e-05
    %v1168 = vadd.f32 %v1104, 1e-05
    %v1169 = vadd.f32 %v1105, 1e-05
    %v1170 = vadd.f32 %v1106, 1e-05
    %v1171 = vadd.f32 %v1107, 1e-05
    %v1172 = vadd.f32 %v1108, 1e-05
    %v1173 = vadd.f32 %v1109, 1e-05
    %v1174 = vadd.f32 %v1110, 1e-05
    %v1175 = vadd.f32 %v1111, 1e-05
    %v1176 = vadd.f32 %v1112, 1e-05
    %v1177 = vadd.f32 %v1113, 1e-05
    %v1178 = vadd.f32 %v1114, 1e-05
    %v1179 = vadd.f32 %v1115, 1e-05
    %v1180 = vadd.f32 %v1116, 1e-05
    %v1181 = vadd.f32 %v1117, 1e-05
    %v1182 = vadd.f32 %v1118, 1e-05
    %v1183 = vadd.f32 %v1119, 1e-05
    %v1184 = vadd.f32 %v1120, 1e-05
    %v1185 = vadd.f32 %v1121, 1e-05
    %v1186 = vadd.f32 %v1122, 1e-05
    %v1187 = vadd.f32 %v1123, 1e-05
    %v1188 = vrsqrt.pop %v1156
    %v1189 = vrsqrt.pop %v1157
    %v1190 = vrsqrt.pop %v1158
    %v1191 = vrsqrt.pop %v1159
    %v1192 = vrsqrt.pop %v1160
    %v1193 = vrsqrt.pop %v1161
    %v1194 = vrsqrt.pop %v1162
    %v1195 = vrsqrt.pop %v1163
    %v1196 = vrsqrt.pop %v1164
    %v1197 = vrsqrt.pop %v1165
    %v1198 = vrsqrt.pop %v1166
    %v1199 = vrsqrt.pop %v1167
    %v1200 = vrsqrt.pop %v1168
    %v1201 = vrsqrt.pop %v1169
    %v1202 = vrsqrt.pop %v1170
    %v1203 = vrsqrt.pop %v1171
    %v1204 = vrsqrt.pop %v1172
    %v1205 = vrsqrt.pop %v1173
    %v1206 = vrsqrt.pop %v1174
    %v1207 = vrsqrt.pop %v1175
    %v1208 = vrsqrt.pop %v1176
    %v1209 = vrsqrt.pop %v1177
    %v1210 = vrsqrt.pop %v1178
    %v1211 = vrsqrt.pop %v1179
    %v1212 = vrsqrt.pop %v1180
    %v1213 = vrsqrt.pop %v1181
    %v1214 = vrsqrt.pop %v1182
    %v1215 = vrsqrt.pop %v1183
    %v1216 = vrsqrt.pop %v1184
    %v1217 = vrsqrt.pop %v1185
    %v1218 = vrsqrt.pop %v1186
    %v1219 = vrsqrt.pop %v1187
    %v1220 = vmul.f32 %v1124, %v1188
    %v1221 = vmul.f32 %v1125, %v1189
    %v1222 = vmul.f32 %v1126, %v1190
    %v1223 = vmul.f32 %v1127, %v1191
    %v1224 = vmul.f32 %v1128, %v1192
    %v1225 = vmul.f32 %v1129, %v1193
    %v1226 = vmul.f32 %v1130, %v1194
    %v1227 = vmul.f32 %v1131, %v1195
    %v1228 = vmul.f32 %v1132, %v1196
    %v1229 = vmul.f32 %v1133, %v1197
    %v1230 = vmul.f32 %v1134, %v1198
    %v1231 = vmul.f32 %v1135, %v1199
    %v1232 = vmul.f32 %v1136, %v1200
    %v1233 = vmul.f32 %v1137, %v1201
    %v1234 = vmul.f32 %v1138, %v1202
    %v1235 = vmul.f32 %v1139, %v1203
    %v1236 = vmul.f32 %v1140, %v1204
    %v1237 = vmul.f32 %v1141, %v1205
    %v1238 = vmul.f32 %v1142, %v1206
    %v1239 = vmul.f32 %v1143, %v1207
    %v1240 = vmul.f32 %v1144, %v1208
    %v1241 = vmul.f32 %v1145, %v1209
    %v1242 = vmul.f32 %v1146, %v1210
    %v1243 = vmul.f32 %v1147, %v1211
    %v1244 = vmul.f32 %v1148, %v1212
    %v1245 = vmul.f32 %v1149, %v1213
    %v1246 = vmul.f32 %v1150, %v1214
    %v1247 = vmul.f32 %v1151, %v1215
    %v1248 = vmul.f32 %v1152, %v1216
    %v1249 = vmul.f32 %v1153, %v1217
    %v1250 = vmul.f32 %v1154, %v1218
    %v1251 = vmul.f32 %v1155, %v1219
    %v1252 = vlaneseq
    %v1253 = vshrl.u32 %v1252, 7
    %v1254 = vsub.s32 1, %v1253
    %v1255 = vrot.slane %v534, %v1254
    %v1256 = vmul.f32 %v1220, %v1255
    %v1257 = vmul.f32 %v1221, %v1255
    %v1258 = vmul.f32 %v1222, %v1255
    %v1259 = vmul.f32 %v1223, %v1255
    %v1260 = vmul.f32 %v1224, %v1255
    %v1261 = vmul.f32 %v1225, %v1255
    %v1262 = vmul.f32 %v1226, %v1255
    %v1263 = vmul.f32 %v1227, %v1255
    %v1264 = vmul.f32 %v1228, %v1255
    %v1265 = vmul.f32 %v1229, %v1255
    %v1266 = vmul.f32 %v1230, %v1255
    %v1267 = vmul.f32 %v1231, %v1255
    %v1268 = vmul.f32 %v1232, %v1255
    %v1269 = vmul.f32 %v1233, %v1255
    %v1270 = vmul.f32 %v1234, %v1255
    %v1271 = vmul.f32 %v1235, %v1255
    %v1272 = vmul.f32 %v1236, %v1255
    %v1273 = vmul.f32 %v1237, %v1255
    %v1274 = vmul.f32 %v1238, %v1255
    %v1275 = vmul.f32 %v1239, %v1255
    %v1276 = vmul.f32 %v1240, %v1255
    %v1277 = vmul.f32 %v1241, %v1255
    %v1278 = vmul.f32 %v1242, %v1255
    %v1279 = vmul.f32 %v1243, %v1255
    %v1280 = vmul.f32 %v1244, %v1255
    %v1281 = vmul.f32 %v1245, %v1255
    %v1282 = vmul.f32 %v1246, %v1255
    %v1283 = vmul.f32 %v1247, %v1255
    %v1284 = vmul.f32 %v1248, %v1255
    %v1285 = vmul.f32 %v1249, %v1255
    %v1286 = vmul.f32 %v1250, %v1255
    %v1287 = vmul.f32 %v1251, %v1255
    %v1288 = vlaneseq
    %v1289 = vshrl.u32 %v1288, 7
    %v1290 = vsub.s32 2, %v1289
    %v1291 = vrot.slane %v534, %v1290
    %v1292 = vadd.f32 %v1256, %v1291
    %v1293 = vadd.f32 %v1257, %v1291
    %v1294 = vadd.f32 %v1258, %v1291
    %v1295 = vadd.f32 %v1259, %v1291
    %v1296 = vadd.f32 %v1260, %v1291
    %v1297 = vadd.f32 %v1261, %v1291
    %v1298 = vadd.f32 %v1262, %v1291
    %v1299 = vadd.f32 %v1263, %v1291
    %v1300 = vadd.f32 %v1264, %v1291
    %v1301 = vadd.f32 %v1265, %v1291
    %v1302 = vadd.f32 %v1266, %v1291
    %v1303 = vadd.f32 %v1267, %v1291
    %v1304 = vadd.f32 %v1268, %v1291
    %v1305 = vadd.f32 %v1269, %v1291
    %v1306 = vadd.f32 %v1270, %v1291
    %v1307 = vadd.f32 %v1271, %v1291
    %v1308 = vadd.f32 %v1272, %v1291
    %v1309 = vadd.f32 %v1273, %v1291
    %v1310 = vadd.f32 %v1274, %v1291
    %v1311 = vadd.f32 %v1275, %v1291
    %v1312 = vadd.f32 %v1276, %v1291
    %v1313 = vadd.f32 %v1277, %v1291
    %v1314 = vadd.f32 %v1278, %v1291
    %v1315 = vadd.f32 %v1279, %v1291
    %v1316 = vadd.f32 %v1280, %v1291
    %v1317 = vadd.f32 %v1281, %v1291
    %v1318 = vadd.f32 %v1282, %v1291
    %v1319 = vadd.f32 %v1283, %v1291
    %v1320 = vadd.f32 %v1284, %v1291
    %v1321 = vadd.f32 %v1285, %v1291
    %v1322 = vadd.f32 %v1286, %v1291
    %v1323 = vadd.f32 %v1287, %v1291
    %v1324 = vsel %vm561, %v1292, 0.0
    %1325 = vadd.xlane.f32.xlu0 %v1324
    %v1326 = vpop.xlane.xlu0 %1325
    %v1327 = vsel %vm561, %v1293, 0.0
    %1328 = vadd.xlane.f32.xlu0 %v1327
    %v1329 = vpop.xlane.xlu0 %1328
    %v1330 = vsel %vm561, %v1294, 0.0
    %1331 = vadd.xlane.f32.xlu0 %v1330
    %v1332 = vpop.xlane.xlu0 %1331
    %v1333 = vsel %vm561, %v1295, 0.0
    %1334 = vadd.xlane.f32.xlu0 %v1333
    %v1335 = vpop.xlane.xlu0 %1334
    %v1336 = vsel %vm561, %v1296, 0.0
    %1337 = vadd.xlane.f32.xlu0 %v1336
    %v1338 = vpop.xlane.xlu0 %1337
    %v1339 = vsel %vm561, %v1297, 0.0
    %1340 = vadd.xlane.f32.xlu0 %v1339
    %v1341 = vpop.xlane.xlu0 %1340
    %v1342 = vsel %vm561, %v1298, 0.0
    %1343 = vadd.xlane.f32.xlu0 %v1342
    %v1344 = vpop.xlane.xlu0 %1343
    %v1345 = vsel %vm561, %v1299, 0.0
    %1346 = vadd.xlane.f32.xlu0 %v1345
    %v1347 = vpop.xlane.xlu0 %1346
    %v1348 = vsel %vm561, %v1300, 0.0
    %1349 = vadd.xlane.f32.xlu0 %v1348
    %v1350 = vpop.xlane.xlu0 %1349
    %v1351 = vsel %vm561, %v1301, 0.0
    %1352 = vadd.xlane.f32.xlu0 %v1351
    %v1353 = vpop.xlane.xlu0 %1352
    %v1354 = vsel %vm561, %v1302, 0.0
    %1355 = vadd.xlane.f32.xlu0 %v1354
    %v1356 = vpop.xlane.xlu0 %1355
    %v1357 = vsel %vm561, %v1303, 0.0
    %1358 = vadd.xlane.f32.xlu0 %v1357
    %v1359 = vpop.xlane.xlu0 %1358
    %v1360 = vsel %vm561, %v1304, 0.0
    %1361 = vadd.xlane.f32.xlu0 %v1360
    %v1362 = vpop.xlane.xlu0 %1361
    %v1363 = vsel %vm561, %v1305, 0.0
    %1364 = vadd.xlane.f32.xlu0 %v1363
    %v1365 = vpop.xlane.xlu0 %1364
    %v1366 = vsel %vm561, %v1306, 0.0
    %1367 = vadd.xlane.f32.xlu0 %v1366
    %v1368 = vpop.xlane.xlu0 %1367
    %v1369 = vsel %vm561, %v1307, 0.0
    %1370 = vadd.xlane.f32.xlu0 %v1369
    %v1371 = vpop.xlane.xlu0 %1370
    %v1372 = vsel %vm561, %v1308, 0.0
    %1373 = vadd.xlane.f32.xlu0 %v1372
    %v1374 = vpop.xlane.xlu0 %1373
    %v1375 = vsel %vm561, %v1309, 0.0
    %1376 = vadd.xlane.f32.xlu0 %v1375
    %v1377 = vpop.xlane.xlu0 %1376
    %v1378 = vsel %vm561, %v1310, 0.0
    %1379 = vadd.xlane.f32.xlu0 %v1378
    %v1380 = vpop.xlane.xlu0 %1379
    %v1381 = vsel %vm561, %v1311, 0.0
    %1382 = vadd.xlane.f32.xlu0 %v1381
    %v1383 = vpop.xlane.xlu0 %1382
    %v1384 = vsel %vm561, %v1312, 0.0
    %1385 = vadd.xlane.f32.xlu0 %v1384
    %v1386 = vpop.xlane.xlu0 %1385
    %v1387 = vsel %vm561, %v1313, 0.0
    %1388 = vadd.xlane.f32.xlu0 %v1387
    %v1389 = vpop.xlane.xlu0 %1388
    %v1390 = vsel %vm561, %v1314, 0.0
    %1391 = vadd.xlane.f32.xlu0 %v1390
    %v1392 = vpop.xlane.xlu0 %1391
    %v1393 = vsel %vm561, %v1315, 0.0
    %1394 = vadd.xlane.f32.xlu0 %v1393
    %v1395 = vpop.xlane.xlu0 %1394
    %v1396 = vsel %vm561, %v1316, 0.0
    %1397 = vadd.xlane.f32.xlu0 %v1396
    %v1398 = vpop.xlane.xlu0 %1397
    %v1399 = vsel %vm561, %v1317, 0.0
    %1400 = vadd.xlane.f32.xlu0 %v1399
    %v1401 = vpop.xlane.xlu0 %1400
    %v1402 = vsel %vm561, %v1318, 0.0
    %1403 = vadd.xlane.f32.xlu0 %v1402
    %v1404 = vpop.xlane.xlu0 %1403
    %v1405 = vsel %vm561, %v1319, 0.0
    %1406 = vadd.xlane.f32.xlu0 %v1405
    %v1407 = vpop.xlane.xlu0 %1406
    %v1408 = vsel %vm561, %v1320, 0.0
    %1409 = vadd.xlane.f32.xlu0 %v1408
    %v1410 = vpop.xlane.xlu0 %1409
    %v1411 = vsel %vm561, %v1321, 0.0
    %1412 = vadd.xlane.f32.xlu0 %v1411
    %v1413 = vpop.xlane.xlu0 %1412
    %v1414 = vsel %vm561, %v1322, 0.0
    %1415 = vadd.xlane.f32.xlu0 %v1414
    %v1416 = vpop.xlane.xlu0 %1415
    %v1417 = vsel %vm561, %v1323, 0.0
    %1418 = vadd.xlane.f32.xlu0 %v1417
    %v1419 = vpop.xlane.xlu0 %1418
    %v1420 = vmul.f32 %v1326, %v867
    %v1421 = vmul.f32 %v1329, %v867
    %v1422 = vmul.f32 %v1332, %v867
    %v1423 = vmul.f32 %v1335, %v867
    %v1424 = vmul.f32 %v1338, %v867
    %v1425 = vmul.f32 %v1341, %v867
    %v1426 = vmul.f32 %v1344, %v867
    %v1427 = vmul.f32 %v1347, %v867
    %v1428 = vmul.f32 %v1350, %v867
    %v1429 = vmul.f32 %v1353, %v867
    %v1430 = vmul.f32 %v1356, %v867
    %v1431 = vmul.f32 %v1359, %v867
    %v1432 = vmul.f32 %v1362, %v867
    %v1433 = vmul.f32 %v1365, %v867
    %v1434 = vmul.f32 %v1368, %v867
    %v1435 = vmul.f32 %v1371, %v867
    %v1436 = vmul.f32 %v1374, %v867
    %v1437 = vmul.f32 %v1377, %v867
    %v1438 = vmul.f32 %v1380, %v867
    %v1439 = vmul.f32 %v1383, %v867
    %v1440 = vmul.f32 %v1386, %v867
    %v1441 = vmul.f32 %v1389, %v867
    %v1442 = vmul.f32 %v1392, %v867
    %v1443 = vmul.f32 %v1395, %v867
    %v1444 = vmul.f32 %v1398, %v867
    %v1445 = vmul.f32 %v1401, %v867
    %v1446 = vmul.f32 %v1404, %v867
    %v1447 = vmul.f32 %v1407, %v867
    %v1448 = vmul.f32 %v1410, %v867
    %v1449 = vmul.f32 %v1413, %v867
    %v1450 = vmul.f32 %v1416, %v867
    %v1451 = vmul.f32 %v1419, %v867
    %v1452 = vmul.f32 %v1292, %v1292
    %v1453 = vmul.f32 %v1293, %v1293
    %v1454 = vmul.f32 %v1294, %v1294
    %v1455 = vmul.f32 %v1295, %v1295
    %v1456 = vmul.f32 %v1296, %v1296
    %v1457 = vmul.f32 %v1297, %v1297
    %v1458 = vmul.f32 %v1298, %v1298
    %v1459 = vmul.f32 %v1299, %v1299
    %v1460 = vmul.f32 %v1300, %v1300
    %v1461 = vmul.f32 %v1301, %v1301
    %v1462 = vmul.f32 %v1302, %v1302
    %v1463 = vmul.f32 %v1303, %v1303
    %v1464 = vmul.f32 %v1304, %v1304
    %v1465 = vmul.f32 %v1305, %v1305
    %v1466 = vmul.f32 %v1306, %v1306
    %v1467 = vmul.f32 %v1307, %v1307
    %v1468 = vmul.f32 %v1308, %v1308
    %v1469 = vmul.f32 %v1309, %v1309
    %v1470 = vmul.f32 %v1310, %v1310
    %v1471 = vmul.f32 %v1311, %v1311
    %v1472 = vmul.f32 %v1312, %v1312
    %v1473 = vmul.f32 %v1313, %v1313
    %v1474 = vmul.f32 %v1314, %v1314
    %v1475 = vmul.f32 %v1315, %v1315
    %v1476 = vmul.f32 %v1316, %v1316
    %v1477 = vmul.f32 %v1317, %v1317
    %v1478 = vmul.f32 %v1318, %v1318
    %v1479 = vmul.f32 %v1319, %v1319
    %v1480 = vmul.f32 %v1320, %v1320
    %v1481 = vmul.f32 %v1321, %v1321
    %v1482 = vmul.f32 %v1322, %v1322
    %v1483 = vmul.f32 %v1323, %v1323
    %v1484 = vsel %vm561, %v1452, 0.0
    %1485 = vadd.xlane.f32.xlu0 %v1484
    %v1486 = vpop.xlane.xlu0 %1485
    %v1487 = vsel %vm561, %v1453, 0.0
    %1488 = vadd.xlane.f32.xlu0 %v1487
    %v1489 = vpop.xlane.xlu0 %1488
    %v1490 = vsel %vm561, %v1454, 0.0
    %1491 = vadd.xlane.f32.xlu0 %v1490
    %v1492 = vpop.xlane.xlu0 %1491
    %v1493 = vsel %vm561, %v1455, 0.0
    %1494 = vadd.xlane.f32.xlu0 %v1493
    %v1495 = vpop.xlane.xlu0 %1494
    %v1496 = vsel %vm561, %v1456, 0.0
    %1497 = vadd.xlane.f32.xlu0 %v1496
    %v1498 = vpop.xlane.xlu0 %1497
    %v1499 = vsel %vm561, %v1457, 0.0
    %1500 = vadd.xlane.f32.xlu0 %v1499
    %v1501 = vpop.xlane.xlu0 %1500
    %v1502 = vsel %vm561, %v1458, 0.0
    %1503 = vadd.xlane.f32.xlu0 %v1502
    %v1504 = vpop.xlane.xlu0 %1503
    %v1505 = vsel %vm561, %v1459, 0.0
    %1506 = vadd.xlane.f32.xlu0 %v1505
    %v1507 = vpop.xlane.xlu0 %1506
    %v1508 = vsel %vm561, %v1460, 0.0
    %1509 = vadd.xlane.f32.xlu0 %v1508
    %v1510 = vpop.xlane.xlu0 %1509
    %v1511 = vsel %vm561, %v1461, 0.0
    %1512 = vadd.xlane.f32.xlu0 %v1511
    %v1513 = vpop.xlane.xlu0 %1512
    %v1514 = vsel %vm561, %v1462, 0.0
    %1515 = vadd.xlane.f32.xlu0 %v1514
    %v1516 = vpop.xlane.xlu0 %1515
    %v1517 = vsel %vm561, %v1463, 0.0
    %1518 = vadd.xlane.f32.xlu0 %v1517
    %v1519 = vpop.xlane.xlu0 %1518
    %v1520 = vsel %vm561, %v1464, 0.0
    %1521 = vadd.xlane.f32.xlu0 %v1520
    %v1522 = vpop.xlane.xlu0 %1521
    %v1523 = vsel %vm561, %v1465, 0.0
    %1524 = vadd.xlane.f32.xlu0 %v1523
    %v1525 = vpop.xlane.xlu0 %1524
    %v1526 = vsel %vm561, %v1466, 0.0
    %1527 = vadd.xlane.f32.xlu0 %v1526
    %v1528 = vpop.xlane.xlu0 %1527
    %v1529 = vsel %vm561, %v1467, 0.0
    %1530 = vadd.xlane.f32.xlu0 %v1529
    %v1531 = vpop.xlane.xlu0 %1530
    %v1532 = vsel %vm561, %v1468, 0.0
    %1533 = vadd.xlane.f32.xlu0 %v1532
    %v1534 = vpop.xlane.xlu0 %1533
    %v1535 = vsel %vm561, %v1469, 0.0
    %1536 = vadd.xlane.f32.xlu0 %v1535
    %v1537 = vpop.xlane.xlu0 %1536
    %v1538 = vsel %vm561, %v1470, 0.0
    %1539 = vadd.xlane.f32.xlu0 %v1538
    %v1540 = vpop.xlane.xlu0 %1539
    %v1541 = vsel %vm561, %v1471, 0.0
    %1542 = vadd.xlane.f32.xlu0 %v1541
    %v1543 = vpop.xlane.xlu0 %1542
    %v1544 = vsel %vm561, %v1472, 0.0
    %1545 = vadd.xlane.f32.xlu0 %v1544
    %v1546 = vpop.xlane.xlu0 %1545
    %v1547 = vsel %vm561, %v1473, 0.0
    %1548 = vadd.xlane.f32.xlu0 %v1547
    %v1549 = vpop.xlane.xlu0 %1548
    %v1550 = vsel %vm561, %v1474, 0.0
    %1551 = vadd.xlane.f32.xlu0 %v1550
    %v1552 = vpop.xlane.xlu0 %1551
    %v1553 = vsel %vm561, %v1475, 0.0
    %1554 = vadd.xlane.f32.xlu0 %v1553
    %v1555 = vpop.xlane.xlu0 %1554
    %v1556 = vsel %vm561, %v1476, 0.0
    %1557 = vadd.xlane.f32.xlu0 %v1556
    %v1558 = vpop.xlane.xlu0 %1557
    %v1559 = vsel %vm561, %v1477, 0.0
    %1560 = vadd.xlane.f32.xlu0 %v1559
    %v1561 = vpop.xlane.xlu0 %1560
    %v1562 = vsel %vm561, %v1478, 0.0
    %1563 = vadd.xlane.f32.xlu0 %v1562
    %v1564 = vpop.xlane.xlu0 %1563
    %v1565 = vsel %vm561, %v1479, 0.0
    %1566 = vadd.xlane.f32.xlu0 %v1565
    %v1567 = vpop.xlane.xlu0 %1566
    %v1568 = vsel %vm561, %v1480, 0.0
    %1569 = vadd.xlane.f32.xlu0 %v1568
    %v1570 = vpop.xlane.xlu0 %1569
    %v1571 = vsel %vm561, %v1481, 0.0
    %1572 = vadd.xlane.f32.xlu0 %v1571
    %v1573 = vpop.xlane.xlu0 %1572
    %v1574 = vsel %vm561, %v1482, 0.0
    %1575 = vadd.xlane.f32.xlu0 %v1574
    %v1576 = vpop.xlane.xlu0 %1575
    %v1577 = vsel %vm561, %v1483, 0.0
    %1578 = vadd.xlane.f32.xlu0 %v1577
    %v1579 = vpop.xlane.xlu0 %1578
    %v1580 = vmul.f32 %v1486, %v867
    %v1581 = vmul.f32 %v1489, %v867
    %v1582 = vmul.f32 %v1492, %v867
    %v1583 = vmul.f32 %v1495, %v867
    %v1584 = vmul.f32 %v1498, %v867
    %v1585 = vmul.f32 %v1501, %v867
    %v1586 = vmul.f32 %v1504, %v867
    %v1587 = vmul.f32 %v1507, %v867
    %v1588 = vmul.f32 %v1510, %v867
    %v1589 = vmul.f32 %v1513, %v867
    %v1590 = vmul.f32 %v1516, %v867
    %v1591 = vmul.f32 %v1519, %v867
    %v1592 = vmul.f32 %v1522, %v867
    %v1593 = vmul.f32 %v1525, %v867
    %v1594 = vmul.f32 %v1528, %v867
    %v1595 = vmul.f32 %v1531, %v867
    %v1596 = vmul.f32 %v1534, %v867
    %v1597 = vmul.f32 %v1537, %v867
    %v1598 = vmul.f32 %v1540, %v867
    %v1599 = vmul.f32 %v1543, %v867
    %v1600 = vmul.f32 %v1546, %v867
    %v1601 = vmul.f32 %v1549, %v867
    %v1602 = vmul.f32 %v1552, %v867
    %v1603 = vmul.f32 %v1555, %v867
    %v1604 = vmul.f32 %v1558, %v867
    %v1605 = vmul.f32 %v1561, %v867
    %v1606 = vmul.f32 %v1564, %v867
    %v1607 = vmul.f32 %v1567, %v867
    %v1608 = vmul.f32 %v1570, %v867
    %v1609 = vmul.f32 %v1573, %v867
    %v1610 = vmul.f32 %v1576, %v867
    %v1611 = vmul.f32 %v1579, %v867
    %v1612 = vmul.f32 %v1420, %v1420
    %v1613 = vmul.f32 %v1421, %v1421
    %v1614 = vmul.f32 %v1422, %v1422
    %v1615 = vmul.f32 %v1423, %v1423
    %v1616 = vmul.f32 %v1424, %v1424
    %v1617 = vmul.f32 %v1425, %v1425
    %v1618 = vmul.f32 %v1426, %v1426
    %v1619 = vmul.f32 %v1427, %v1427
    %v1620 = vmul.f32 %v1428, %v1428
    %v1621 = vmul.f32 %v1429, %v1429
    %v1622 = vmul.f32 %v1430, %v1430
    %v1623 = vmul.f32 %v1431, %v1431
    %v1624 = vmul.f32 %v1432, %v1432
    %v1625 = vmul.f32 %v1433, %v1433
    %v1626 = vmul.f32 %v1434, %v1434
    %v1627 = vmul.f32 %v1435, %v1435
    %v1628 = vmul.f32 %v1436, %v1436
    %v1629 = vmul.f32 %v1437, %v1437
    %v1630 = vmul.f32 %v1438, %v1438
    %v1631 = vmul.f32 %v1439, %v1439
    %v1632 = vmul.f32 %v1440, %v1440
    %v1633 = vmul.f32 %v1441, %v1441
    %v1634 = vmul.f32 %v1442, %v1442
    %v1635 = vmul.f32 %v1443, %v1443
    %v1636 = vmul.f32 %v1444, %v1444
    %v1637 = vmul.f32 %v1445, %v1445
    %v1638 = vmul.f32 %v1446, %v1446
    %v1639 = vmul.f32 %v1447, %v1447
    %v1640 = vmul.f32 %v1448, %v1448
    %v1641 = vmul.f32 %v1449, %v1449
    %v1642 = vmul.f32 %v1450, %v1450
    %v1643 = vmul.f32 %v1451, %v1451
    %v1644 = vsub.f32 %v1580, %v1612
    %v1645 = vsub.f32 %v1581, %v1613
    %v1646 = vsub.f32 %v1582, %v1614
    %v1647 = vsub.f32 %v1583, %v1615
    %v1648 = vsub.f32 %v1584, %v1616
    %v1649 = vsub.f32 %v1585, %v1617
    %v1650 = vsub.f32 %v1586, %v1618
    %v1651 = vsub.f32 %v1587, %v1619
    %v1652 = vsub.f32 %v1588, %v1620
    %v1653 = vsub.f32 %v1589, %v1621
    %v1654 = vsub.f32 %v1590, %v1622
    %v1655 = vsub.f32 %v1591, %v1623
    %v1656 = vsub.f32 %v1592, %v1624
    %v1657 = vsub.f32 %v1593, %v1625
    %v1658 = vsub.f32 %v1594, %v1626
    %v1659 = vsub.f32 %v1595, %v1627
    %v1660 = vsub.f32 %v1596, %v1628
    %v1661 = vsub.f32 %v1597, %v1629
    %v1662 = vsub.f32 %v1598, %v1630
    %v1663 = vsub.f32 %v1599, %v1631
    %v1664 = vsub.f32 %v1600, %v1632
    %v1665 = vsub.f32 %v1601, %v1633
    %v1666 = vsub.f32 %v1602, %v1634
    %v1667 = vsub.f32 %v1603, %v1635
    %v1668 = vsub.f32 %v1604, %v1636
    %v1669 = vsub.f32 %v1605, %v1637
    %v1670 = vsub.f32 %v1606, %v1638
    %v1671 = vsub.f32 %v1607, %v1639
    %v1672 = vsub.f32 %v1608, %v1640
    %v1673 = vsub.f32 %v1609, %v1641
    %v1674 = vsub.f32 %v1610, %v1642
    %v1675 = vsub.f32 %v1611, %v1643
    %v1676 = vsub.f32 %v1292, %v1420
    %v1677 = vsub.f32 %v1293, %v1421
    %v1678 = vsub.f32 %v1294, %v1422
    %v1679 = vsub.f32 %v1295, %v1423
    %v1680 = vsub.f32 %v1296, %v1424
    %v1681 = vsub.f32 %v1297, %v1425
    %v1682 = vsub.f32 %v1298, %v1426
    %v1683 = vsub.f32 %v1299, %v1427
    %v1684 = vsub.f32 %v1300, %v1428
    %v1685 = vsub.f32 %v1301, %v1429
    %v1686 = vsub.f32 %v1302, %v1430
    %v1687 = vsub.f32 %v1303, %v1431
    %v1688 = vsub.f32 %v1304, %v1432
    %v1689 = vsub.f32 %v1305, %v1433
    %v1690 = vsub.f32 %v1306, %v1434
    %v1691 = vsub.f32 %v1307, %v1435
    %v1692 = vsub.f32 %v1308, %v1436
    %v1693 = vsub.f32 %v1309, %v1437
    %v1694 = vsub.f32 %v1310, %v1438
    %v1695 = vsub.f32 %v1311, %v1439
    %v1696 = vsub.f32 %v1312, %v1440
    %v1697 = vsub.f32 %v1313, %v1441
    %v1698 = vsub.f32 %v1314, %v1442
    %v1699 = vsub.f32 %v1315, %v1443
    %v1700 = vsub.f32 %v1316, %v1444
    %v1701 = vsub.f32 %v1317, %v1445
    %v1702 = vsub.f32 %v1318, %v1446
    %v1703 = vsub.f32 %v1319, %v1447
    %v1704 = vsub.f32 %v1320, %v1448
    %v1705 = vsub.f32 %v1321, %v1449
    %v1706 = vsub.f32 %v1322, %v1450
    %v1707 = vsub.f32 %v1323, %v1451
    %v1708 = vadd.f32 %v1644, 1e-05
    %v1709 = vadd.f32 %v1645, 1e-05
    %v1710 = vadd.f32 %v1646, 1e-05
    %v1711 = vadd.f32 %v1647, 1e-05
    %v1712 = vadd.f32 %v1648, 1e-05
    %v1713 = vadd.f32 %v1649, 1e-05
    %v1714 = vadd.f32 %v1650, 1e-05
    %v1715 = vadd.f32 %v1651, 1e-05
    %v1716 = vadd.f32 %v1652, 1e-05
    %v1717 = vadd.f32 %v1653, 1e-05
    %v1718 = vadd.f32 %v1654, 1e-05
    %v1719 = vadd.f32 %v1655, 1e-05
    %v1720 = vadd.f32 %v1656, 1e-05
    %v1721 = vadd.f32 %v1657, 1e-05
    %v1722 = vadd.f32 %v1658, 1e-05
    %v1723 = vadd.f32 %v1659, 1e-05
    %v1724 = vadd.f32 %v1660, 1e-05
    %v1725 = vadd.f32 %v1661, 1e-05
    %v1726 = vadd.f32 %v1662, 1e-05
    %v1727 = vadd.f32 %v1663, 1e-05
    %v1728 = vadd.f32 %v1664, 1e-05
    %v1729 = vadd.f32 %v1665, 1e-05
    %v1730 = vadd.f32 %v1666, 1e-05
    %v1731 = vadd.f32 %v1667, 1e-05
    %v1732 = vadd.f32 %v1668, 1e-05
    %v1733 = vadd.f32 %v1669, 1e-05
    %v1734 = vadd.f32 %v1670, 1e-05
    %v1735 = vadd.f32 %v1671, 1e-05
    %v1736 = vadd.f32 %v1672, 1e-05
    %v1737 = vadd.f32 %v1673, 1e-05
    %v1738 = vadd.f32 %v1674, 1e-05
    %v1739 = vadd.f32 %v1675, 1e-05
    %v1740 = vrsqrt.pop %v1708
    %v1741 = vrsqrt.pop %v1709
    %v1742 = vrsqrt.pop %v1710
    %v1743 = vrsqrt.pop %v1711
    %v1744 = vrsqrt.pop %v1712
    %v1745 = vrsqrt.pop %v1713
    %v1746 = vrsqrt.pop %v1714
    %v1747 = vrsqrt.pop %v1715
    %v1748 = vrsqrt.pop %v1716
    %v1749 = vrsqrt.pop %v1717
    %v1750 = vrsqrt.pop %v1718
    %v1751 = vrsqrt.pop %v1719
    %v1752 = vrsqrt.pop %v1720
    %v1753 = vrsqrt.pop %v1721
    %v1754 = vrsqrt.pop %v1722
    %v1755 = vrsqrt.pop %v1723
    %v1756 = vrsqrt.pop %v1724
    %v1757 = vrsqrt.pop %v1725
    %v1758 = vrsqrt.pop %v1726
    %v1759 = vrsqrt.pop %v1727
    %v1760 = vrsqrt.pop %v1728
    %v1761 = vrsqrt.pop %v1729
    %v1762 = vrsqrt.pop %v1730
    %v1763 = vrsqrt.pop %v1731
    %v1764 = vrsqrt.pop %v1732
    %v1765 = vrsqrt.pop %v1733
    %v1766 = vrsqrt.pop %v1734
    %v1767 = vrsqrt.pop %v1735
    %v1768 = vrsqrt.pop %v1736
    %v1769 = vrsqrt.pop %v1737
    %v1770 = vrsqrt.pop %v1738
    %v1771 = vrsqrt.pop %v1739
    %v1772 = vmul.f32 %v1676, %v1740
    %v1773 = vmul.f32 %v1677, %v1741
    %v1774 = vmul.f32 %v1678, %v1742
    %v1775 = vmul.f32 %v1679, %v1743
    %v1776 = vmul.f32 %v1680, %v1744
    %v1777 = vmul.f32 %v1681, %v1745
    %v1778 = vmul.f32 %v1682, %v1746
    %v1779 = vmul.f32 %v1683, %v1747
    %v1780 = vmul.f32 %v1684, %v1748
    %v1781 = vmul.f32 %v1685, %v1749
    %v1782 = vmul.f32 %v1686, %v1750
    %v1783 = vmul.f32 %v1687, %v1751
    %v1784 = vmul.f32 %v1688, %v1752
    %v1785 = vmul.f32 %v1689, %v1753
    %v1786 = vmul.f32 %v1690, %v1754
    %v1787 = vmul.f32 %v1691, %v1755
    %v1788 = vmul.f32 %v1692, %v1756
    %v1789 = vmul.f32 %v1693, %v1757
    %v1790 = vmul.f32 %v1694, %v1758
    %v1791 = vmul.f32 %v1695, %v1759
    %v1792 = vmul.f32 %v1696, %v1760
    %v1793 = vmul.f32 %v1697, %v1761
    %v1794 = vmul.f32 %v1698, %v1762
    %v1795 = vmul.f32 %v1699, %v1763
    %v1796 = vmul.f32 %v1700, %v1764
    %v1797 = vmul.f32 %v1701, %v1765
    %v1798 = vmul.f32 %v1702, %v1766
    %v1799 = vmul.f32 %v1703, %v1767
    %v1800 = vmul.f32 %v1704, %v1768
    %v1801 = vmul.f32 %v1705, %v1769
    %v1802 = vmul.f32 %v1706, %v1770
    %v1803 = vmul.f32 %v1707, %v1771
    %v1804 = vlaneseq
    %v1805 = vshrl.u32 %v1804, 7
    %v1806 = vsub.s32 3, %v1805
    %v1807 = vrot.slane %v534, %v1806
    %v1808 = vmul.f32 %v1772, %v1807
    %v1809 = vmul.f32 %v1773, %v1807
    %v1810 = vmul.f32 %v1774, %v1807
    %v1811 = vmul.f32 %v1775, %v1807
    %v1812 = vmul.f32 %v1776, %v1807
    %v1813 = vmul.f32 %v1777, %v1807
    %v1814 = vmul.f32 %v1778, %v1807
    %v1815 = vmul.f32 %v1779, %v1807
    %v1816 = vmul.f32 %v1780, %v1807
    %v1817 = vmul.f32 %v1781, %v1807
    %v1818 = vmul.f32 %v1782, %v1807
    %v1819 = vmul.f32 %v1783, %v1807
    %v1820 = vmul.f32 %v1784, %v1807
    %v1821 = vmul.f32 %v1785, %v1807
    %v1822 = vmul.f32 %v1786, %v1807
    %v1823 = vmul.f32 %v1787, %v1807
    %v1824 = vmul.f32 %v1788, %v1807
    %v1825 = vmul.f32 %v1789, %v1807
    %v1826 = vmul.f32 %v1790, %v1807
    %v1827 = vmul.f32 %v1791, %v1807
    %v1828 = vmul.f32 %v1792, %v1807
    %v1829 = vmul.f32 %v1793, %v1807
    %v1830 = vmul.f32 %v1794, %v1807
    %v1831 = vmul.f32 %v1795, %v1807
    %v1832 = vmul.f32 %v1796, %v1807
    %v1833 = vmul.f32 %v1797, %v1807
    %v1834 = vmul.f32 %v1798, %v1807
    %v1835 = vmul.f32 %v1799, %v1807
    %v1836 = vmul.f32 %v1800, %v1807
    %v1837 = vmul.f32 %v1801, %v1807
    %v1838 = vmul.f32 %v1802, %v1807
    %v1839 = vmul.f32 %v1803, %v1807
    %v1840 = vlaneseq
    %v1841 = vshrl.u32 %v1840, 7
    %v1842 = vsub.s32 4, %v1841
    %v1843 = vrot.slane %v534, %v1842
    %v1844 = vadd.f32 %v1808, %v1843
    %v1845 = vadd.f32 %v1809, %v1843
    %v1846 = vadd.f32 %v1810, %v1843
    %v1847 = vadd.f32 %v1811, %v1843
    %v1848 = vadd.f32 %v1812, %v1843
    %v1849 = vadd.f32 %v1813, %v1843
    %v1850 = vadd.f32 %v1814, %v1843
    %v1851 = vadd.f32 %v1815, %v1843
    %v1852 = vadd.f32 %v1816, %v1843
    %v1853 = vadd.f32 %v1817, %v1843
    %v1854 = vadd.f32 %v1818, %v1843
    %v1855 = vadd.f32 %v1819, %v1843
    %v1856 = vadd.f32 %v1820, %v1843
    %v1857 = vadd.f32 %v1821, %v1843
    %v1858 = vadd.f32 %v1822, %v1843
    %v1859 = vadd.f32 %v1823, %v1843
    %v1860 = vadd.f32 %v1824, %v1843
    %v1861 = vadd.f32 %v1825, %v1843
    %v1862 = vadd.f32 %v1826, %v1843
    %v1863 = vadd.f32 %v1827, %v1843
    %v1864 = vadd.f32 %v1828, %v1843
    %v1865 = vadd.f32 %v1829, %v1843
    %v1866 = vadd.f32 %v1830, %v1843
    %v1867 = vadd.f32 %v1831, %v1843
    %v1868 = vadd.f32 %v1832, %v1843
    %v1869 = vadd.f32 %v1833, %v1843
    %v1870 = vadd.f32 %v1834, %v1843
    %v1871 = vadd.f32 %v1835, %v1843
    %v1872 = vadd.f32 %v1836, %v1843
    %v1873 = vadd.f32 %v1837, %v1843
    %v1874 = vadd.f32 %v1838, %v1843
    %v1875 = vadd.f32 %v1839, %v1843
    %v1876 = vmax.f32 %v1844, 0.0
    %v1877 = vmax.f32 %v1845, 0.0
    %v1878 = vmax.f32 %v1846, 0.0
    %v1879 = vmax.f32 %v1847, 0.0
    %v1880 = vmax.f32 %v1848, 0.0
    %v1881 = vmax.f32 %v1849, 0.0
    %v1882 = vmax.f32 %v1850, 0.0
    %v1883 = vmax.f32 %v1851, 0.0
    %v1884 = vmax.f32 %v1852, 0.0
    %v1885 = vmax.f32 %v1853, 0.0
    %v1886 = vmax.f32 %v1854, 0.0
    %v1887 = vmax.f32 %v1855, 0.0
    %v1888 = vmax.f32 %v1856, 0.0
    %v1889 = vmax.f32 %v1857, 0.0
    %v1890 = vmax.f32 %v1858, 0.0
    %v1891 = vmax.f32 %v1859, 0.0
    %v1892 = vmax.f32 %v1860, 0.0
    %v1893 = vmax.f32 %v1861, 0.0
    %v1894 = vmax.f32 %v1862, 0.0
    %v1895 = vmax.f32 %v1863, 0.0
    %v1896 = vmax.f32 %v1864, 0.0
    %v1897 = vmax.f32 %v1865, 0.0
    %v1898 = vmax.f32 %v1866, 0.0
    %v1899 = vmax.f32 %v1867, 0.0
    %v1900 = vmax.f32 %v1868, 0.0
    %v1901 = vmax.f32 %v1869, 0.0
    %v1902 = vmax.f32 %v1870, 0.0
    %v1903 = vmax.f32 %v1871, 0.0
    %v1904 = vmax.f32 %v1872, 0.0
    %v1905 = vmax.f32 %v1873, 0.0
    %v1906 = vmax.f32 %v1874, 0.0
    %v1907 = vmax.f32 %v1875, 0.0
    %v1908 = vsel %vm561, %v1876, 0.0
    %v1909 = vsel %vm561, %v1877, 0.0
    %v1910 = vadd.f32 %v1908, %v1909
    %v1911 = vrot.slane %v1910, 4
    %v1912 = vadd.f32 %v1910, %v1911
    %v1913 = vrot.slane %v1912, 2
    %v1914 = vadd.f32 %v1912, %v1913
    %v1915 = vrot.slane %v1914, 1
    %v1916 = vadd.f32 %v1914, %v1915
    %v1917 = vsel %vm561, %v1878, 0.0
    %v1918 = vsel %vm561, %v1879, 0.0
    %v1919 = vadd.f32 %v1917, %v1918
    %v1920 = vrot.slane %v1919, 4
    %v1921 = vadd.f32 %v1919, %v1920
    %v1922 = vrot.slane %v1921, 2
    %v1923 = vadd.f32 %v1921, %v1922
    %v1924 = vrot.slane %v1923, 1
    %v1925 = vadd.f32 %v1923, %v1924
    %v1926 = vsel %vm561, %v1880, 0.0
    %v1927 = vsel %vm561, %v1881, 0.0
    %v1928 = vadd.f32 %v1926, %v1927
    %v1929 = vrot.slane %v1928, 4
    %v1930 = vadd.f32 %v1928, %v1929
    %v1931 = vrot.slane %v1930, 2
    %v1932 = vadd.f32 %v1930, %v1931
    %v1933 = vrot.slane %v1932, 1
    %v1934 = vadd.f32 %v1932, %v1933
    %v1935 = vsel %vm561, %v1882, 0.0
    %v1936 = vsel %vm561, %v1883, 0.0
    %v1937 = vadd.f32 %v1935, %v1936
    %v1938 = vrot.slane %v1937, 4
    %v1939 = vadd.f32 %v1937, %v1938
    %v1940 = vrot.slane %v1939, 2
    %v1941 = vadd.f32 %v1939, %v1940
    %v1942 = vrot.slane %v1941, 1
    %v1943 = vadd.f32 %v1941, %v1942
    %v1944 = vsel %vm561, %v1884, 0.0
    %v1945 = vsel %vm561, %v1885, 0.0
    %v1946 = vadd.f32 %v1944, %v1945
    %v1947 = vrot.slane %v1946, 4
    %v1948 = vadd.f32 %v1946, %v1947
    %v1949 = vrot.slane %v1948, 2
    %v1950 = vadd.f32 %v1948, %v1949
    %v1951 = vrot.slane %v1950, 1
    %v1952 = vadd.f32 %v1950, %v1951
    %v1953 = vsel %vm561, %v1886, 0.0
    %v1954 = vsel %vm561, %v1887, 0.0
    %v1955 = vadd.f32 %v1953, %v1954
    %v1956 = vrot.slane %v1955, 4
    %v1957 = vadd.f32 %v1955, %v1956
    %v1958 = vrot.slane %v1957, 2
    %v1959 = vadd.f32 %v1957, %v1958
    %v1960 = vrot.slane %v1959, 1
    %v1961 = vadd.f32 %v1959, %v1960
    %v1962 = vsel %vm561, %v1888, 0.0
    %v1963 = vsel %vm561, %v1889, 0.0
    %v1964 = vadd.f32 %v1962, %v1963
    %v1965 = vrot.slane %v1964, 4
    %v1966 = vadd.f32 %v1964, %v1965
    %v1967 = vrot.slane %v1966, 2
    %v1968 = vadd.f32 %v1966, %v1967
    %v1969 = vrot.slane %v1968, 1
    %v1970 = vadd.f32 %v1968, %v1969
    %v1971 = vsel %vm561, %v1890, 0.0
    %v1972 = vsel %vm561, %v1891, 0.0
    %v1973 = vadd.f32 %v1971, %v1972
    %v1974 = vrot.slane %v1973, 4
    %v1975 = vadd.f32 %v1973, %v1974
    %v1976 = vrot.slane %v1975, 2
    %v1977 = vadd.f32 %v1975, %v1976
    %v1978 = vrot.slane %v1977, 1
    %v1979 = vadd.f32 %v1977, %v1978
    %v1980 = vsel %vm561, %v1892, 0.0
    %v1981 = vsel %vm561, %v1893, 0.0
    %v1982 = vadd.f32 %v1980, %v1981
    %v1983 = vrot.slane %v1982, 4
    %v1984 = vadd.f32 %v1982, %v1983
    %v1985 = vrot.slane %v1984, 2
    %v1986 = vadd.f32 %v1984, %v1985
    %v1987 = vrot.slane %v1986, 1
    %v1988 = vadd.f32 %v1986, %v1987
    %v1989 = vsel %vm561, %v1894, 0.0
    %v1990 = vsel %vm561, %v1895, 0.0
    %v1991 = vadd.f32 %v1989, %v1990
    %v1992 = vrot.slane %v1991, 4
    %v1993 = vadd.f32 %v1991, %v1992
    %v1994 = vrot.slane %v1993, 2
    %v1995 = vadd.f32 %v1993, %v1994
    %v1996 = vrot.slane %v1995, 1
    %v1997 = vadd.f32 %v1995, %v1996
    %v1998 = vsel %vm561, %v1896, 0.0
    %v1999 = vsel %vm561, %v1897, 0.0
    %v2000 = vadd.f32 %v1998, %v1999
    %v2001 = vrot.slane %v2000, 4
    %v2002 = vadd.f32 %v2000, %v2001
    %v2003 = vrot.slane %v2002, 2
    %v2004 = vadd.f32 %v2002, %v2003
    %v2005 = vrot.slane %v2004, 1
    %v2006 = vadd.f32 %v2004, %v2005
    %v2007 = vsel %vm561, %v1898, 0.0
    %v2008 = vsel %vm561, %v1899, 0.0
    %v2009 = vadd.f32 %v2007, %v2008
    %v2010 = vrot.slane %v2009, 4
    %v2011 = vadd.f32 %v2009, %v2010
    %v2012 = vrot.slane %v2011, 2
    %v2013 = vadd.f32 %v2011, %v2012
    %v2014 = vrot.slane %v2013, 1
    %v2015 = vadd.f32 %v2013, %v2014
    %v2016 = vsel %vm561, %v1900, 0.0
    %v2017 = vsel %vm561, %v1901, 0.0
    %v2018 = vadd.f32 %v2016, %v2017
    %v2019 = vrot.slane %v2018, 4
    %v2020 = vadd.f32 %v2018, %v2019
    %v2021 = vrot.slane %v2020, 2
    %v2022 = vadd.f32 %v2020, %v2021
    %v2023 = vrot.slane %v2022, 1
    %v2024 = vadd.f32 %v2022, %v2023
    %v2025 = vsel %vm561, %v1902, 0.0
    %v2026 = vsel %vm561, %v1903, 0.0
    %v2027 = vadd.f32 %v2025, %v2026
    %v2028 = vrot.slane %v2027, 4
    %v2029 = vadd.f32 %v2027, %v2028
    %v2030 = vrot.slane %v2029, 2
    %v2031 = vadd.f32 %v2029, %v2030
    %v2032 = vrot.slane %v2031, 1
    %v2033 = vadd.f32 %v2031, %v2032
    %v2034 = vsel %vm561, %v1904, 0.0
    %v2035 = vsel %vm561, %v1905, 0.0
    %v2036 = vadd.f32 %v2034, %v2035
    %v2037 = vrot.slane %v2036, 4
    %v2038 = vadd.f32 %v2036, %v2037
    %v2039 = vrot.slane %v2038, 2
    %v2040 = vadd.f32 %v2038, %v2039
    %v2041 = vrot.slane %v2040, 1
    %v2042 = vadd.f32 %v2040, %v2041
    %v2043 = vsel %vm561, %v1906, 0.0
    %v2044 = vsel %vm561, %v1907, 0.0
    %v2045 = vadd.f32 %v2043, %v2044
    %v2046 = vrot.slane %v2045, 4
    %v2047 = vadd.f32 %v2045, %v2046
    %v2048 = vrot.slane %v2047, 2
    %v2049 = vadd.f32 %v2047, %v2048
    %v2050 = vrot.slane %v2049, 1
    %v2051 = vadd.f32 %v2049, %v2050
    %v2052 = vld [vmem:[%s4] sm:$0xff]
    %v2053 = vld [vmem:[%s4 + $0x8] sm:$0xff]
    %v2054 = vld [vmem:[%s4 + $0x10] sm:$0xff]
    %v2055 = vld [vmem:[%s4 + $0x18] sm:$0xff]
    %v2056 = vld [vmem:[%s5] sm:$0x1]
    %v2058 = vlaneseq
    %v2059 = vshrl.u32 %v2058, 7
    %v2060 = vsub.s32 0, %v2059
    %v2061 = vrot.slane %v2056, %v2060
    %vm2079 = vcmask 1041409
    %v2080 = vsel %vm2079, %v1925, %v1916
    %vm2081 = vcmask 1042434
    %v2082 = vsel %vm2081, %v1934, %v2080
    %vm2083 = vcmask 1043459
    %v2084 = vsel %vm2083, %v1943, %v2082
    %vm2085 = vcmask 1044484
    %v2086 = vsel %vm2085, %v1952, %v2084
    %vm2087 = vcmask 1045509
    %v2088 = vsel %vm2087, %v1961, %v2086
    %vm2089 = vcmask 1046534
    %v2090 = vsel %vm2089, %v1970, %v2088
    %vm2091 = vcmask 1047559
    %v2092 = vsel %vm2091, %v1979, %v2090
    %v2093 = vsel %vm2079, %v1997, %v1988
    %v2094 = vsel %vm2081, %v2006, %v2093
    %v2095 = vsel %vm2083, %v2015, %v2094
    %v2096 = vsel %vm2085, %v2024, %v2095
    %v2097 = vsel %vm2087, %v2033, %v2096
    %v2098 = vsel %vm2089, %v2042, %v2097
    %v2099 = vsel %vm2091, %v2051, %v2098
    %v2100 = vsel %vm561, %v2092, 0
    %v2102 = vsel %vm561, %v2099, 0
    %2104 = vmatprep.subr.mxu0 0.0
    %2105 = vmatpush1.msra.mxu0 0.0
    %2106 = vmatprep.subr.mxu0 0.0
    %2107 = vmatpush1.msra.mxu0 0.0
    %2108 = vmatprep.subr.mxu0 0.0
    %2109 = vmatpush1.msra.mxu0 0.0
    %2110 = vmatprep.subr.mxu0 0.0
    %2111 = vmatpush1.msra.mxu0 0.0
    %2112 = vmatprep.subr.mxu0 0.0
    %2113 = vmatpush1.msra.mxu0 0.0
    %2114 = vmatprep.subr.mxu0 0.0
    %2115 = vmatpush1.msra.mxu0 0.0
    %2116 = vmatprep.subr.mxu0 0.0
    %2117 = vmatpush1.msra.mxu0 0.0
    %2118 = vmatprep.subr.mxu0 0.0
    %2119 = vmatpush1.msra.mxu0 0.0
    %2120 = vmatprep.subr.mxu0 0.0
    %2121 = vmatpush1.msra.mxu0 0.0
    %2122 = vmatprep.subr.mxu0 0.0
    %2123 = vmatpush1.msra.mxu0 0.0
    %2124 = vmatprep.subr.mxu0 0.0
    %2125 = vmatpush1.msra.mxu0 0.0
    %2126 = vmatprep.subr.mxu0 0.0
    %2127 = vmatpush1.msra.mxu0 0.0
    %2128 = vmatprep.subr.mxu0 0.0
    %2129 = vmatpush1.msra.mxu0 %v2055
    %2130 = vmatprep.subr.mxu0 0.0
    %2131 = vmatpush1.msra.mxu0 %v2054
    %2132 = vmatprep.subr.mxu0 0.0
    %2133 = vmatpush1.msra.mxu0 %v2053
    %2134 = vmatprep.subr.mxu0 0.0
    %2135 = vmatpush1.msra.mxu0 %v2052
    %2136 = vmatprep.subr.mxu0 0.0
    %2137 = vmatpush2.msra.mxu0 0.0
    %2138 = vmatprep.subr.mxu0 0.0
    %2139 = vmatpush2.msra.mxu0 0.0
    %2140 = vmatprep.subr.mxu0 0.0
    %2141 = vmatpush2.msra.mxu0 0.0
    %2142 = vmatprep.subr.mxu0 0.0
    %2143 = vmatpush2.msra.mxu0 0.0
    %2144 = vmatprep.subr.mxu0 0.0
    %2145 = vmatpush2.msra.mxu0 0.0
    %2146 = vmatprep.subr.mxu0 0.0
    %2147 = vmatpush2.msra.mxu0 0.0
    %2148 = vmatprep.subr.mxu0 0.0
    %2149 = vmatpush2.msra.mxu0 0.0
    %2150 = vmatprep.subr.mxu0 0.0
    %2151 = vmatpush2.msra.mxu0 0.0
    %2152 = vmatprep.subr.mxu0 0.0
    %2153 = vmatpush2.msra.mxu0 0.0
    %2154 = vmatprep.subr.mxu0 0.0
    %2155 = vmatpush2.msra.mxu0 0.0
    %2156 = vmatprep.subr.mxu0 0.0
    %2157 = vmatpush2.msra.mxu0 0.0
    %2158 = vmatprep.subr.mxu0 0.0
    %2159 = vmatpush2.msra.mxu0 0.0
    %2160 = vmatprep.subr.mxu0 0.0
    %2161 = vmatpush2.msra.mxu0 0.0
    %2162 = vmatprep.subr.mxu0 0.0
    %2163 = vmatpush2.msra.mxu0 0.0
    %2164 = vmatprep.subr.mxu0 0.0
    %2165 = vmatpush2.msra.mxu0 0.0
    %2166 = vmatprep.subr.mxu0 0.0
    %2167 = vmatpush2.msra.mxu0 0.0
    %2168 = vmatprep.mubr.f32.mxu0 0.0
    %2169 = vmatmul.mubr.f32.gmra.mxu0 %v2100
    %v2170 = vpop.f32.mrf.mxu0
    %v2171 = vadd.f32 %v2061, %v2170
    %v2172 = vpop.f32.mrf.mxu0
    %2173 = vmatprep.mubr.f32.mxu0 0.0
    %2174 = vmatmul.mubr.f32.gmra.mxu0 %v2102
    %v2175 = vpop.f32.mrf.mxu0
    %v2176 = vadd.f32 %v2061, %v2175
    %v2177 = vpop.f32.mrf.mxu0
    %2178 = vdwg.mxu0
    %vm2179 = vcmask 31744
    %2180 = vst.msk [vmem:[%s6] sm:$0xff] %vm2179, %v2171
    %2181 = vst.msk [vmem:[%s6 + $0x8] sm:$0xff] %vm2179, %v2176
    // Predicated region
    $region34: #{tpu_custom_call.1} parent=1 // pred_check
      _
    $region35: #{tpu_custom_call.1} parent=1 // pred_check_branch
      %2183 = sbr.rel (0) target = $region37
    $region36: #{tpu_custom_call.1} parent=1 // pred_region
      _
    $region37: #{tpu_custom_call.1} parent=1 // pred_fallthru
      _
    // Predicated region
    $region38: #{tpu_custom_call.1} parent=1 // pred_check
      _
    $region39: #{tpu_custom_call.1} parent=1 // pred_check_branch
      %2185 = sbr.rel (0) target = $region41
    $region40: #{tpu_custom_call.1} parent=1 // pred_region
      _
    $region41: #{tpu_custom_call.1} parent=1 // pred_fallthru
      _
    %2186 = vsyncpa [#allocation3], 1
    %2187 = vsyncpa [#allocation5], 1

</llo_original>
